<compile_context>
chip_gen: v6e
topology: v6e:2x2x1
jax: 0.10.0
libtpu: 0.0.40
codegen_flags: <defaults>
</compile_context>

<pallas_src>
import math

import jax
import jax.numpy as jnp
from jax.experimental import pallas as pl
from jax.experimental.pallas import tpu as pltpu

# ---- small, module-consistent shapes -------------------------------------------------
B = 2            # batch
L = 8            # sequence length
D = 32           # d_model (hidden)
H = 4            # attention heads
HD = D // H      # head dim
FF = 4 * D       # feed-forward hidden (= 128)
N_LAYERS = 2     # encoder blocks
LANES = 128      # TPU lane width -- all kernel outputs are kept 128-lane dense
VOCAB = LANES    # vocab chosen = 128 so MLM output slab is exactly lane-dense
N_SEG = 3        # segment embedding table size

NEG_INF = -1e9   # attention masked_fill value (matches tutorial masked_fill(mask==0, -1e9))
NEG_PAD = -1e30  # logit padding for the lane-padded NSP head
LN_EPS = 1e-5    # nn.LayerNorm default eps


# ---- in-kernel helpers ----------------------------------------------------------------
def _layer_norm(x, g, b):
    mu = jnp.mean(x, axis=-1, keepdims=True)
    var = jnp.mean((x - mu) ** 2, axis=-1, keepdims=True)
    return (x - mu) * jax.lax.rsqrt(var + LN_EPS) * g + b


def _log_softmax(z):
    m = jnp.max(z, axis=-1, keepdims=True)
    s = z - m
    return s - jnp.log(jnp.sum(jnp.exp(s), axis=-1, keepdims=True))


# ---- fused BERTLM kernel --------------------------------------------------------------
# grid = (N_LAYERS,); per-layer weights are streamed via index_map, activations live in a
# VMEM scratch across grid steps, heads run in the last step.
def bert_lm_kernel(mask_ref, x0_ref, wqkv_ref, wo_ref, w1_ref, w2_ref, sp_ref,
                   hw_ref, hb_ref, nsp_ref, mlm_ref, x_scr):
    layer = pl.program_id(0)

    @pl.when(layer == 0)
    def _init():
        x_scr[...] = x0_ref[...]                       # embeddings -> resident activations

    x = x_scr[...]                                     # (B*L, D) f32
    xb = x.astype(jnp.bfloat16)

    # ---- packed small params for this layer: (4, 128) ----
    # row 0: [bq | bk | bv]          (3*D = 96 lanes)
    # row 1: b1                      (FF  = 128 lanes)
    # row 2: [bo | b2]               (2*D = 64 lanes)
    # row 3: [ln1_g | ln1_b | ln2_g | ln2_b]   (4*D = 128 lanes)
    sp = sp_ref[0]
    b_qkv = sp[0:1, 0:3 * D]
    b1 = sp[1:2, :]
    b_o = sp[2:3, 0:D]
    b2 = sp[2:3, D:2 * D]
    ln1g, ln1b = sp[3:4, 0:D], sp[3:4, D:2 * D]
    ln2g, ln2b = sp[3:4, 2 * D:3 * D], sp[3:4, 3 * D:4 * D]

    # ---- fused QKV projection: one (B*L, D) @ (D, 3D) matmul ----
    qkv = jnp.dot(xb, wqkv_ref[0], preferred_element_type=jnp.float32) + b_qkv
    q = qkv[:, 0:D]
    k = qkv[:, D:2 * D]
    v = qkv[:, 2 * D:3 * D]

    keep = mask_ref[...]                               # (B, L), 1.0 keep / 0.0 pad
    kmask = keep[:, None, :] > 0.0                     # (B, 1, L) keys mask
    scale = 1.0 / math.sqrt(HD)
    wo = wo_ref[0]                                     # (D, D) bf16

    # ---- multi-head attention: batched-over-batch einsums per head; output projection
    #      folded into the head loop (no transposes / concatenates) ----
    attn = jnp.zeros((B * L, D), jnp.float32)
    for h in range(H):                                 # small static unroll (H = 4)
        sl = slice(h * HD, (h + 1) * HD)
        qh = q[:, sl].reshape(B, L, HD).astype(jnp.bfloat16)
        kh = k[:, sl].reshape(B, L, HD).astype(jnp.bfloat16)
        vh = v[:, sl].reshape(B, L, HD).astype(jnp.bfloat16)
        s = jnp.einsum('bqd,bkd->bqk', qh, kh,
                       preferred_element_type=jnp.float32) * scale          # (B, L, L)
        s = jnp.where(kmask, s, NEG_INF)               # masked_fill(mask == 0, -1e9)
        s = s - jnp.max(s, axis=-1, keepdims=True)
        p = jnp.exp(s)
        p = p * pl.reciprocal(jnp.sum(p, axis=-1, keepdims=True), approx=True)
        ctx = jnp.einsum('bqk,bkd->bqd', p.astype(jnp.bfloat16), vh,
                         preferred_element_type=jnp.float32)                # (B, L, HD)
        attn = attn + jnp.dot(ctx.reshape(B * L, HD).astype(jnp.bfloat16),
                              wo[sl, :], preferred_element_type=jnp.float32)
    attn = attn + b_o

    h1 = _layer_norm(attn + x, ln1g, ln1b)             # post-norm residual (f32)

    # ---- feed-forward ----
    ff = jnp.dot(h1.astype(jnp.bfloat16), w1_ref[0], preferred_element_type=jnp.float32) + b1
    # TODO(synk): tutorial-style (codertimo BERT-pytorch) GELU is the tanh approximation; if the
    # reference EncoderLayer uses nn.GELU() (exact erf), switch approximate=False.
    ff = jax.nn.gelu(ff, approximate=True)
    ff = jnp.dot(ff.astype(jnp.bfloat16), w2_ref[0], preferred_element_type=jnp.float32) + b2
    h2 = _layer_norm(ff + h1, ln2g, ln2b)

    x_scr[...] = h2                                    # stays resident for the next layer

    # ---- prediction heads on the final layer only ----
    @pl.when(layer == pl.num_programs(0) - 1)
    def _heads():
        hb = h2.astype(jnp.bfloat16)
        # MaskedLanguageModel: Linear(D, VOCAB) + LogSoftmax ; VOCAB == 128 -> lane-dense store
        mlm_logits = jnp.dot(hb, hw_ref[0], preferred_element_type=jnp.float32) + hb_ref[0:1, :]
        mlm_ref[...] = _log_softmax(mlm_logits)        # (B*L, 128)
        # NextSentencePrediction: Linear(D, 2) on x[:, 0] + LogSoftmax, lane-padded to 128
        cls = h2.reshape(B, L, D)[:, 0, :]             # (B, D)
        nsp_logits = jnp.dot(cls.astype(jnp.bfloat16), hw_ref[1],
                             preferred_element_type=jnp.float32) + hb_ref[1:2, :]
        nsp_ref[...] = _log_softmax(nsp_logits)        # (B, 128); lanes >= 2 are ~ -inf pads


def _build_fused_call():
    grid_spec = pltpu.PrefetchScalarGridSpec(
        num_scalar_prefetch=0,
        grid=(N_LAYERS,),
        in_specs=[
            pl.BlockSpec((B, L), lambda l: (0, 0)),                # keys-keep mask
            pl.BlockSpec((B * L, D), lambda l: (0, 0)),            # embeddings
            pl.BlockSpec((1, D, 3 * D), lambda l: (l, 0, 0)),      # fused QKV weight (per layer)
            pl.BlockSpec((1, D, D), lambda l: (l, 0, 0)),          # attention out projection
            pl.BlockSpec((1, D, FF), lambda l: (l, 0, 0)),         # FFN in
            pl.BlockSpec((1, FF, D), lambda l: (l, 0, 0)),         # FFN out
            pl.BlockSpec((1, 4, LANES), lambda l: (l, 0, 0)),      # packed biases + LN params
            pl.BlockSpec((2, D, LANES), lambda l: (0, 0, 0)),      # [mlm_w, nsp_w(padded)]
            pl.BlockSpec((2, LANES), lambda l: (0, 0)),            # [mlm_b, nsp_b(padded)]
        ],
        out_specs=[
            pl.BlockSpec((B, LANES), lambda l: (0, 0)),            # NSP log-probs (lane padded)
            pl.BlockSpec((B * L, LANES), lambda l: (0, 0)),        # MLM log-probs (lane dense)
        ],
        scratch_shapes=[pltpu.VMEM((B * L, D), jnp.float32)],      # resident activations
    )
    return pl.pallas_call(
        bert_lm_kernel,
        out_shape=(jax.ShapeDtypeStruct((B, LANES), jnp.float32),
                   jax.ShapeDtypeStruct((B * L, LANES), jnp.float32)),
        grid_spec=grid_spec,
        compiler_params=pltpu.CompilerParams(dimension_semantics=("arbitrary",)),
    )


_FUSED_CALL = _build_fused_call()


# ---- parameters -----------------------------------------------------------------------
def _linear_params(key, fan_in, fan_out):
    bound = 1.0 / math.sqrt(fan_in)
    kw, kb = jax.random.split(key)
    w = jax.random.uniform(kw, (fan_in, fan_out), jnp.float32, -bound, bound)
    b = jax.random.uniform(kb, (fan_out,), jnp.float32, -bound, bound)
    return w, b


def _sinusoidal_pe(max_len, d):
    pos = jnp.arange(max_len, dtype=jnp.float32)[:, None]
    div = jnp.exp(jnp.arange(0, d, 2, dtype=jnp.float32) * -(math.log(10000.0) / d))
    pe = jnp.zeros((max_len, d), jnp.float32)
    pe = pe.at[:, 0::2].set(jnp.sin(pos * div))
    pe = pe.at[:, 1::2].set(jnp.cos(pos * div))
    return pe


def init_params(key):
    keys = jax.random.split(key, 5)
    params = {}
    # BERTEmbedding: token (padding_idx=0) + segment (padding_idx=0) + sinusoidal positional
    tok = 0.02 * jax.random.normal(keys[0], (VOCAB, D), jnp.float32)
    params["tok_emb"] = tok.at[0].set(0.0)
    seg = 0.02 * jax.random.normal(keys[1], (N_SEG, D), jnp.float32)
    params["seg_emb"] = seg.at[0].set(0.0)
    params["pos_emb"] = _sinusoidal_pe(L, D)

    wqkv_l, wo_l, w1_l, w2_l, sp_l = [], [], [], [], []
    lkeys = jax.random.split(keys[2], N_LAYERS)
    for i in range(N_LAYERS):
        lk = jax.random.split(lkeys[i], 6)
        wq, bq = _linear_params(lk[0], D, D)
        wk, bk = _linear_params(lk[1], D, D)
        wv, bv = _linear_params(lk[2], D, D)
        wo, bo = _linear_params(lk[3], D, D)
        w1, b1 = _linear_params(lk[4], D, FF)
        w2, b2 = _linear_params(lk[5], FF, D)
        wqkv_l.append(jnp.concatenate([wq, wk, wv], axis=1))        # (D, 3D)
        wo_l.append(wo)
        w1_l.append(w1)
        w2_l.append(w2)
        # packed small-param slab (4, 128); LN betas stay zero, LN gammas set to 1.
        sp = jnp.zeros((4, LANES), jnp.float32)
        sp = sp.at[0, 0:3 * D].set(jnp.concatenate([bq, bk, bv]))
        sp = sp.at[1, 0:FF].set(b1)
        sp = sp.at[2, 0:D].set(bo)
        sp = sp.at[2, D:2 * D].set(b2)
        sp = sp.at[3, 0:D].set(1.0)          # ln1 gamma
        sp = sp.at[3, 2 * D:3 * D].set(1.0)  # ln2 gamma
        sp_l.append(sp)

    params["wqkv"] = jnp.stack(wqkv_l).astype(jnp.bfloat16)   # (N_LAYERS, D, 3D)
    params["wo"] = jnp.stack(wo_l).astype(jnp.bfloat16)       # (N_LAYERS, D, D)
    params["w1"] = jnp.stack(w1_l).astype(jnp.bfloat16)       # (N_LAYERS, D, FF)
    params["w2"] = jnp.stack(w2_l).astype(jnp.bfloat16)       # (N_LAYERS, FF, D)
    params["sp"] = jnp.stack(sp_l)                            # (N_LAYERS, 4, 128) f32

    # prediction heads, packed and lane-padded to 128
    nsp_w, nsp_b = _linear_params(keys[3], D, 2)
    mlm_w, mlm_b = _linear_params(keys[4], D, VOCAB)
    head_w = jnp.zeros((2, D, LANES), jnp.float32)
    head_w = head_w.at[0, :, :VOCAB].set(mlm_w)
    head_w = head_w.at[1, :, :2].set(nsp_w)
    head_b = jnp.zeros((2, LANES), jnp.float32)
    head_b = head_b.at[0, :VOCAB].set(mlm_b)
    head_b = head_b.at[1].set(NEG_PAD)                        # pad NSP logits to ~ -inf
    head_b = head_b.at[1, :2].set(nsp_b)
    params["head_w"] = head_w.astype(jnp.bfloat16)
    params["head_b"] = head_b
    return params


# ---- full BERTLM forward --------------------------------------------------------------
@jax.jit
def bert_lm_forward(tokens, segments, params):
    # mask = (x > 0) keys mask; the kernel broadcasts it over heads and query positions.
    keep = (tokens > 0).astype(jnp.float32)                       # (B, L)

    # BERTEmbedding gather (glue, plain JAX); dropout = identity.
    x0 = (jnp.take(params["tok_emb"], tokens, axis=0)
          + jnp.take(params["seg_emb"], segments, axis=0)
          + params["pos_emb"][None, :, :])                        # (B, L, D)
    x0 = x0.reshape(B * L, D).astype(jnp.float32)

    nsp_pad, mlm_pad = _FUSED_CALL(
        keep, x0, params["wqkv"], params["wo"], params["w1"], params["w2"],
        params["sp"], params["head_w"], params["head_b"])

    nsp_logp = nsp_pad[:, :2]                                     # drop -inf lane padding
    mlm_logp = mlm_pad.reshape(B, L, VOCAB)
    return nsp_logp, mlm_logp


# TODO(synk): the reference tutorial's exact EncoderLayer source is not included; this uses the
# standard post-norm block (MHA -> add&norm -> GELU FFN -> add&norm) with separate LN params.
# TODO(synk): on v7x an extra "parallel" grid axis over batch/query tiles would use the 2nd
# TensorCore, but at B=2/L=8 there is no useful parallel work to split.

if __name__ == "__main__":
    key = jax.random.PRNGKey(0)
    pkey, tkey, skey = jax.random.split(key, 3)
    params = init_params(pkey)

    tokens = jax.random.randint(tkey, (B, L), 1, VOCAB, dtype=jnp.int32)
    tokens = tokens.at[:, -2:].set(0)               # a little padding to exercise the mask
    segments = jax.random.randint(skey, (B, L), 1, N_SEG, dtype=jnp.int32)

    nsp_logp, mlm_logp = bert_lm_forward(tokens, segments, params)
    nsp_logp = jax.block_until_ready(nsp_logp)
    mlm_logp = jax.block_until_ready(mlm_logp)

    assert nsp_logp.shape == (B, 2)
    assert mlm_logp.shape == (B, L, VOCAB)
    assert bool(jnp.all(jnp.isfinite(nsp_logp))) and bool(jnp.all(jnp.isfinite(mlm_logp)))
    # log-softmax sanity: probabilities sum to 1
    assert bool(jnp.allclose(jnp.exp(nsp_logp).sum(-1), 1.0, atol=1e-3))
    assert bool(jnp.allclose(jnp.exp(mlm_logp).sum(-1), 1.0, atol=1e-3))

    print("KERNEL_OK")
</pallas_src>

<mosaic_0001>
module attributes {stable_mosaic.version = 11 : i64} {
  func.func @bert_lm_kernel(%arg0: i32, %arg1: memref<2x8xf32, #tpu.memory_space<vmem>>, %arg2: memref<16x32xf32, #tpu.memory_space<vmem>>, %arg3: memref<1x32x96xbf16, #tpu.memory_space<vmem>>, %arg4: memref<1x32x32xbf16, #tpu.memory_space<vmem>>, %arg5: memref<1x32x128xbf16, #tpu.memory_space<vmem>>, %arg6: memref<1x128x32xbf16, #tpu.memory_space<vmem>>, %arg7: memref<1x4x128xf32, #tpu.memory_space<vmem>>, %arg8: memref<2x32x128xbf16, #tpu.memory_space<vmem>>, %arg9: memref<2x128xf32, #tpu.memory_space<vmem>>, %arg10: memref<2x128xf32, #tpu.memory_space<vmem>>, %arg11: memref<16x128xf32, #tpu.memory_space<vmem>>, %arg12: memref<16x32xf32, #tpu.memory_space<vmem>>) attributes {dimension_semantics = [#tpu.dimension_semantics<arbitrary>], iteration_bounds = array<i64: 2>, scalar_prefetch = 0 : i64, scratch_operands = 1 : i64, tpu.core_type = #tpu.core_type<tc>, window_params = [{pipeline_mode = #tpu.pipeline_mode<synchronous>, transform_indices = @transform_0, window_bounds = array<i64: 2, 8>}, {pipeline_mode = #tpu.pipeline_mode<synchronous>, transform_indices = @transform_1, window_bounds = array<i64: 16, 32>}, {transform_indices = @transform_2, window_bounds = array<i64: 1, 32, 96>}, {transform_indices = @transform_3, window_bounds = array<i64: 1, 32, 32>}, {transform_indices = @transform_4, window_bounds = array<i64: 1, 32, 128>}, {transform_indices = @transform_5, window_bounds = array<i64: 1, 128, 32>}, {transform_indices = @transform_6, window_bounds = array<i64: 1, 4, 128>}, {pipeline_mode = #tpu.pipeline_mode<synchronous>, transform_indices = @transform_7, window_bounds = array<i64: 2, 32, 128>}, {pipeline_mode = #tpu.pipeline_mode<synchronous>, transform_indices = @transform_8, window_bounds = array<i64: 2, 128>}, {pipeline_mode = #tpu.pipeline_mode<synchronous>, transform_indices = @transform_9, window_bounds = array<i64: 2, 128>}, {pipeline_mode = #tpu.pipeline_mode<synchronous>, transform_indices = @transform_10, window_bounds = array<i64: 16, 128>}]} {
    %c0_i32 = arith.constant 0 : i32
    %0 = arith.cmpi eq, %arg0, %c0_i32 : i32
    %1 = arith.extui %0 : i1 to i32
    %c0_i32_0 = arith.constant 0 : i32
    %2 = arith.cmpi ne, %1, %c0_i32_0 : i32
    scf.if %2 {
      %c0_68 = arith.constant 0 : index
      %c0_69 = arith.constant 0 : index
      %239 = vector.load %arg2[%c0_68, %c0_69] : memref<16x32xf32, #tpu.memory_space<vmem>>, vector<16x32xf32>
      %c0_70 = arith.constant 0 : index
      %c0_71 = arith.constant 0 : index
      %240 = vector.load %arg12[%c0_70, %c0_71] : memref<16x32xf32, #tpu.memory_space<vmem>>, vector<16x32xf32>
      tpu.vector_store %arg12[%c0_70, %c0_71], %239 {strides = array<i32>} : memref<16x32xf32, #tpu.memory_space<vmem>>, vector<16x32xf32>,
    } else {
    }
    %c0 = arith.constant 0 : index
    %c0_1 = arith.constant 0 : index
    %3 = vector.load %arg12[%c0, %c0_1] : memref<16x32xf32, #tpu.memory_space<vmem>>, vector<16x32xf32>
    %4 = arith.truncf %3 : vector<16x32xf32> to vector<16x32xbf16>
    %c0_2 = arith.constant 0 : index
    %c0_3 = arith.constant 0 : index
    %c0_4 = arith.constant 0 : index
    %5 = vector.load %arg7[%c0_2, %c0_3, %c0_4] : memref<1x4x128xf32, #tpu.memory_space<vmem>>, vector<1x4x128xf32>
    %6 = vector.shape_cast %5 : vector<1x4x128xf32> to vector<4x128xf32>
    %7 = vector.extract_strided_slice %6 {offsets = [0, 0], sizes = [1, 96], strides = [1, 1]} : vector<4x128xf32> to vector<1x96xf32>
    %8 = vector.extract_strided_slice %6 {offsets = [1, 0], sizes = [1, 128], strides = [1, 1]} : vector<4x128xf32> to vector<1x128xf32>
    %9 = vector.extract_strided_slice %6 {offsets = [2, 0], sizes = [1, 32], strides = [1, 1]} : vector<4x128xf32> to vector<1x32xf32>
    %10 = vector.extract_strided_slice %6 {offsets = [2, 32], sizes = [1, 32], strides = [1, 1]} : vector<4x128xf32> to vector<1x32xf32>
    %11 = vector.extract_strided_slice %6 {offsets = [3, 0], sizes = [1, 32], strides = [1, 1]} : vector<4x128xf32> to vector<1x32xf32>
    %12 = vector.extract_strided_slice %6 {offsets = [3, 32], sizes = [1, 32], strides = [1, 1]} : vector<4x128xf32> to vector<1x32xf32>
    %13 = vector.extract_strided_slice %6 {offsets = [3, 64], sizes = [1, 32], strides = [1, 1]} : vector<4x128xf32> to vector<1x32xf32>
    %14 = vector.extract_strided_slice %6 {offsets = [3, 96], sizes = [1, 32], strides = [1, 1]} : vector<4x128xf32> to vector<1x32xf32>
    %c0_5 = arith.constant 0 : index
    %c0_6 = arith.constant 0 : index
    %c0_7 = arith.constant 0 : index
    %15 = vector.load %arg3[%c0_5, %c0_6, %c0_7] : memref<1x32x96xbf16, #tpu.memory_space<vmem>>, vector<1x32x96xbf16>
    %16 = vector.shape_cast %15 : vector<1x32x96xbf16> to vector<32x96xbf16>
    %cst = arith.constant dense<0.000000e+00> : vector<16x96xf32>
    %17 = tpu.matmul %4, %16, %cst {dimension_numbers = #tpu.dot_dimension_numbers<[1], [0], [0], [1], [0, 0, 1, 1], [], []>} : vector<16x32xbf16>, vector<32x96xbf16>, vector<16x96xf32> -> vector<16x96xf32>
    %18 = vector.broadcast %7 : vector<1x96xf32> to vector<16x96xf32>
    %19 = arith.addf %17, %18 : vector<16x96xf32>
    %20 = vector.extract_strided_slice %19 {offsets = [0, 0], sizes = [16, 32], strides = [1, 1]} : vector<16x96xf32> to vector<16x32xf32>
    %21 = vector.extract_strided_slice %19 {offsets = [0, 32], sizes = [16, 32], strides = [1, 1]} : vector<16x96xf32> to vector<16x32xf32>
    %22 = vector.extract_strided_slice %19 {offsets = [0, 64], sizes = [16, 32], strides = [1, 1]} : vector<16x96xf32> to vector<16x32xf32>
    %c0_8 = arith.constant 0 : index
    %c0_9 = arith.constant 0 : index
    %23 = vector.load %arg1[%c0_8, %c0_9] : memref<2x8xf32, #tpu.memory_space<vmem>>, vector<2x8xf32>
    %24 = vector.shape_cast %23 : vector<2x8xf32> to vector<2x1x8xf32>
    %cst_10 = arith.constant 0.000000e+00 : f32
    %25 = vector.broadcast %cst_10 : f32 to vector<2x1x8xf32>
    %26 = arith.cmpf ogt, %24, %25 : vector<2x1x8xf32>
    %c0_11 = arith.constant 0 : index
    %c0_12 = arith.constant 0 : index
    %c0_13 = arith.constant 0 : index
    %27 = vector.load %arg4[%c0_11, %c0_12, %c0_13] : memref<1x32x32xbf16, #tpu.memory_space<vmem>>, vector<1x32x32xbf16>
    %28 = vector.shape_cast %27 : vector<1x32x32xbf16> to vector<32x32xbf16>
    %cst_14 = arith.constant 0.000000e+00 : f32
    %29 = vector.broadcast %cst_14 : f32 to vector<16x32xf32>
    %30 = vector.extract_strided_slice %20 {offsets = [0, 0], sizes = [16, 8], strides = [1, 1]} : vector<16x32xf32> to vector<16x8xf32>
    %31 = vector.shape_cast %30 : vector<16x8xf32> to vector<2x8x8xf32>
    %32 = arith.truncf %31 : vector<2x8x8xf32> to vector<2x8x8xbf16>
    %33 = vector.extract_strided_slice %21 {offsets = [0, 0], sizes = [16, 8], strides = [1, 1]} : vector<16x32xf32> to vector<16x8xf32>
    %34 = vector.shape_cast %33 : vector<16x8xf32> to vector<2x8x8xf32>
    %35 = arith.truncf %34 : vector<2x8x8xf32> to vector<2x8x8xbf16>
    %36 = vector.extract_strided_slice %22 {offsets = [0, 0], sizes = [16, 8], strides = [1, 1]} : vector<16x32xf32> to vector<16x8xf32>
    %37 = vector.shape_cast %36 : vector<16x8xf32> to vector<2x8x8xf32>
    %38 = arith.truncf %37 : vector<2x8x8xf32> to vector<2x8x8xbf16>
    "tpu.trace_start"() <{level = 10 : i32, message = "bqd,bkd->bqk"}> : () -> ()
    %cst_15 = arith.constant dense<0.000000e+00> : vector<2x8x8xf32>
    %39 = tpu.matmul %32, %35, %cst_15 {dimension_numbers = #tpu.dot_dimension_numbers<[2], [2], [1], [1], [0, 0, 0, 1, 1, 1], [0], [0]>} : vector<2x8x8xbf16>, vector<2x8x8xbf16>, vector<2x8x8xf32> -> vector<2x8x8xf32>
    "tpu.trace_stop"() : () -> ()
    %cst_16 = arith.constant 0.353553385 : f32
    %40 = vector.broadcast %cst_16 : f32 to vector<2x8x8xf32>
    %41 = arith.mulf %39, %40 : vector<2x8x8xf32>
    %cst_17 = arith.constant -1.000000e+09 : f32
    %42 = vector.shape_cast %26 : vector<2x1x8xi1> to vector<2x1x8xi1>
    %43 = vector.broadcast %42 : vector<2x1x8xi1> to vector<2x8x8xi1>
    %44 = vector.broadcast %cst_17 : f32 to vector<2x8x8xf32>
    %45 = arith.select %43, %41, %44 : vector<2x8x8xi1>, vector<2x8x8xf32>
    %cst_18 = arith.constant dense<0xFF800000> : vector<2x8xf32>
    %46 = vector.multi_reduction <maximumf>, %45, %cst_18 [2] : vector<2x8x8xf32> to vector<2x8xf32>
    %47 = vector.shape_cast %46 : vector<2x8xf32> to vector<2x8x1xf32>
    %48 = vector.broadcast %47 : vector<2x8x1xf32> to vector<2x8x8xf32>
    %49 = arith.subf %45, %48 : vector<2x8x8xf32>
    %50 = math.exp %49 : vector<2x8x8xf32>
    %cst_19 = arith.constant dense<0.000000e+00> : vector<2x8xf32>
    %51 = vector.multi_reduction <add>, %50, %cst_19 [2] : vector<2x8x8xf32> to vector<2x8xf32>
    %52 = vector.shape_cast %51 : vector<2x8xf32> to vector<2x8x1xf32>
    %53 = tpu.reciprocal %52 {approx = true} : vector<2x8x1xf32> -> vector<2x8x1xf32>
    %54 = vector.broadcast %53 : vector<2x8x1xf32> to vector<2x8x8xf32>
    %55 = arith.mulf %50, %54 : vector<2x8x8xf32>
    %56 = arith.truncf %55 : vector<2x8x8xf32> to vector<2x8x8xbf16>
    "tpu.trace_start"() <{level = 10 : i32, message = "bqk,bkd->bqd"}> : () -> ()
    %cst_20 = arith.constant dense<0.000000e+00> : vector<2x8x8xf32>
    %57 = tpu.matmul %56, %38, %cst_20 {dimension_numbers = #tpu.dot_dimension_numbers<[2], [1], [1], [2], [0, 0, 0, 1, 1, 2], [0], [0]>} : vector<2x8x8xbf16>, vector<2x8x8xbf16>, vector<2x8x8xf32> -> vector<2x8x8xf32>
    "tpu.trace_stop"() : () -> ()
    %58 = vector.shape_cast %57 : vector<2x8x8xf32> to vector<16x8xf32>
    %59 = arith.truncf %58 : vector<16x8xf32> to vector<16x8xbf16>
    %60 = vector.extract_strided_slice %28 {offsets = [0, 0], sizes = [8, 32], strides = [1, 1]} : vector<32x32xbf16> to vector<8x32xbf16>
    %cst_21 = arith.constant dense<0.000000e+00> : vector<16x32xf32>
    %61 = tpu.matmul %59, %60, %cst_21 {dimension_numbers = #tpu.dot_dimension_numbers<[1], [0], [0], [1], [0, 0, 1, 1], [], []>} : vector<16x8xbf16>, vector<8x32xbf16>, vector<16x32xf32> -> vector<16x32xf32>
    %62 = arith.addf %29, %61 : vector<16x32xf32>
    %63 = vector.extract_strided_slice %20 {offsets = [0, 8], sizes = [16, 8], strides = [1, 1]} : vector<16x32xf32> to vector<16x8xf32>
    %64 = vector.shape_cast %63 : vector<16x8xf32> to vector<2x8x8xf32>
    %65 = arith.truncf %64 : vector<2x8x8xf32> to vector<2x8x8xbf16>
    %66 = vector.extract_strided_slice %21 {offsets = [0, 8], sizes = [16, 8], strides = [1, 1]} : vector<16x32xf32> to vector<16x8xf32>
    %67 = vector.shape_cast %66 : vector<16x8xf32> to vector<2x8x8xf32>
    %68 = arith.truncf %67 : vector<2x8x8xf32> to vector<2x8x8xbf16>
    %69 = vector.extract_strided_slice %22 {offsets = [0, 8], sizes = [16, 8], strides = [1, 1]} : vector<16x32xf32> to vector<16x8xf32>
    %70 = vector.shape_cast %69 : vector<16x8xf32> to vector<2x8x8xf32>
    %71 = arith.truncf %70 : vector<2x8x8xf32> to vector<2x8x8xbf16>
    "tpu.trace_start"() <{level = 10 : i32, message = "bqd,bkd->bqk"}> : () -> ()
    %cst_22 = arith.constant dense<0.000000e+00> : vector<2x8x8xf32>
    %72 = tpu.matmul %65, %68, %cst_22 {dimension_numbers = #tpu.dot_dimension_numbers<[2], [2], [1], [1], [0, 0, 0, 1, 1, 1], [0], [0]>} : vector<2x8x8xbf16>, vector<2x8x8xbf16>, vector<2x8x8xf32> -> vector<2x8x8xf32>
    "tpu.trace_stop"() : () -> ()
    %cst_23 = arith.constant 0.353553385 : f32
    %73 = vector.broadcast %cst_23 : f32 to vector<2x8x8xf32>
    %74 = arith.mulf %72, %73 : vector<2x8x8xf32>
    %cst_24 = arith.constant -1.000000e+09 : f32
    %75 = vector.shape_cast %26 : vector<2x1x8xi1> to vector<2x1x8xi1>
    %76 = vector.broadcast %75 : vector<2x1x8xi1> to vector<2x8x8xi1>
    %77 = vector.broadcast %cst_24 : f32 to vector<2x8x8xf32>
    %78 = arith.select %76, %74, %77 : vector<2x8x8xi1>, vector<2x8x8xf32>
    %cst_25 = arith.constant dense<0xFF800000> : vector<2x8xf32>
    %79 = vector.multi_reduction <maximumf>, %78, %cst_25 [2] : vector<2x8x8xf32> to vector<2x8xf32>
    %80 = vector.shape_cast %79 : vector<2x8xf32> to vector<2x8x1xf32>
    %81 = vector.broadcast %80 : vector<2x8x1xf32> to vector<2x8x8xf32>
    %82 = arith.subf %78, %81 : vector<2x8x8xf32>
    %83 = math.exp %82 : vector<2x8x8xf32>
    %cst_26 = arith.constant dense<0.000000e+00> : vector<2x8xf32>
    %84 = vector.multi_reduction <add>, %83, %cst_26 [2] : vector<2x8x8xf32> to vector<2x8xf32>
    %85 = vector.shape_cast %84 : vector<2x8xf32> to vector<2x8x1xf32>
    %86 = tpu.reciprocal %85 {approx = true} : vector<2x8x1xf32> -> vector<2x8x1xf32>
    %87 = vector.broadcast %86 : vector<2x8x1xf32> to vector<2x8x8xf32>
    %88 = arith.mulf %83, %87 : vector<2x8x8xf32>
    %89 = arith.truncf %88 : vector<2x8x8xf32> to vector<2x8x8xbf16>
    "tpu.trace_start"() <{level = 10 : i32, message = "bqk,bkd->bqd"}> : () -> ()
    %cst_27 = arith.constant dense<0.000000e+00> : vector<2x8x8xf32>
    %90 = tpu.matmul %89, %71, %cst_27 {dimension_numbers = #tpu.dot_dimension_numbers<[2], [1], [1], [2], [0, 0, 0, 1, 1, 2], [0], [0]>} : vector<2x8x8xbf16>, vector<2x8x8xbf16>, vector<2x8x8xf32> -> vector<2x8x8xf32>
    "tpu.trace_stop"() : () -> ()
    %91 = vector.shape_cast %90 : vector<2x8x8xf32> to vector<16x8xf32>
    %92 = arith.truncf %91 : vector<16x8xf32> to vector<16x8xbf16>
    %93 = vector.extract_strided_slice %28 {offsets = [8, 0], sizes = [8, 32], strides = [1, 1]} : vector<32x32xbf16> to vector<8x32xbf16>
    %cst_28 = arith.constant dense<0.000000e+00> : vector<16x32xf32>
    %94 = tpu.matmul %92, %93, %cst_28 {dimension_numbers = #tpu.dot_dimension_numbers<[1], [0], [0], [1], [0, 0, 1, 1], [], []>} : vector<16x8xbf16>, vector<8x32xbf16>, vector<16x32xf32> -> vector<16x32xf32>
    %95 = arith.addf %62, %94 : vector<16x32xf32>
    %96 = vector.extract_strided_slice %20 {offsets = [0, 16], sizes = [16, 8], strides = [1, 1]} : vector<16x32xf32> to vector<16x8xf32>
    %97 = vector.shape_cast %96 : vector<16x8xf32> to vector<2x8x8xf32>
    %98 = arith.truncf %97 : vector<2x8x8xf32> to vector<2x8x8xbf16>
    %99 = vector.extract_strided_slice %21 {offsets = [0, 16], sizes = [16, 8], strides = [1, 1]} : vector<16x32xf32> to vector<16x8xf32>
    %100 = vector.shape_cast %99 : vector<16x8xf32> to vector<2x8x8xf32>
    %101 = arith.truncf %100 : vector<2x8x8xf32> to vector<2x8x8xbf16>
    %102 = vector.extract_strided_slice %22 {offsets = [0, 16], sizes = [16, 8], strides = [1, 1]} : vector<16x32xf32> to vector<16x8xf32>
    %103 = vector.shape_cast %102 : vector<16x8xf32> to vector<2x8x8xf32>
    %104 = arith.truncf %103 : vector<2x8x8xf32> to vector<2x8x8xbf16>
    "tpu.trace_start"() <{level = 10 : i32, message = "bqd,bkd->bqk"}> : () -> ()
    %cst_29 = arith.constant dense<0.000000e+00> : vector<2x8x8xf32>
    %105 = tpu.matmul %98, %101, %cst_29 {dimension_numbers = #tpu.dot_dimension_numbers<[2], [2], [1], [1], [0, 0, 0, 1, 1, 1], [0], [0]>} : vector<2x8x8xbf16>, vector<2x8x8xbf16>, vector<2x8x8xf32> -> vector<2x8x8xf32>
    "tpu.trace_stop"() : () -> ()
    %cst_30 = arith.constant 0.353553385 : f32
    %106 = vector.broadcast %cst_30 : f32 to vector<2x8x8xf32>
    %107 = arith.mulf %105, %106 : vector<2x8x8xf32>
    %cst_31 = arith.constant -1.000000e+09 : f32
    %108 = vector.shape_cast %26 : vector<2x1x8xi1> to vector<2x1x8xi1>
    %109 = vector.broadcast %108 : vector<2x1x8xi1> to vector<2x8x8xi1>
    %110 = vector.broadcast %cst_31 : f32 to vector<2x8x8xf32>
    %111 = arith.select %109, %107, %110 : vector<2x8x8xi1>, vector<2x8x8xf32>
    %cst_32 = arith.constant dense<0xFF800000> : vector<2x8xf32>
    %112 = vector.multi_reduction <maximumf>, %111, %cst_32 [2] : vector<2x8x8xf32> to vector<2x8xf32>
    %113 = vector.shape_cast %112 : vector<2x8xf32> to vector<2x8x1xf32>
    %114 = vector.broadcast %113 : vector<2x8x1xf32> to vector<2x8x8xf32>
    %115 = arith.subf %111, %114 : vector<2x8x8xf32>
    %116 = math.exp %115 : vector<2x8x8xf32>
    %cst_33 = arith.constant dense<0.000000e+00> : vector<2x8xf32>
    %117 = vector.multi_reduction <add>, %116, %cst_33 [2] : vector<2x8x8xf32> to vector<2x8xf32>
    %118 = vector.shape_cast %117 : vector<2x8xf32> to vector<2x8x1xf32>
    %119 = tpu.reciprocal %118 {approx = true} : vector<2x8x1xf32> -> vector<2x8x1xf32>
    %120 = vector.broadcast %119 : vector<2x8x1xf32> to vector<2x8x8xf32>
    %121 = arith.mulf %116, %120 : vector<2x8x8xf32>
    %122 = arith.truncf %121 : vector<2x8x8xf32> to vector<2x8x8xbf16>
    "tpu.trace_start"() <{level = 10 : i32, message = "bqk,bkd->bqd"}> : () -> ()
    %cst_34 = arith.constant dense<0.000000e+00> : vector<2x8x8xf32>
    %123 = tpu.matmul %122, %104, %cst_34 {dimension_numbers = #tpu.dot_dimension_numbers<[2], [1], [1], [2], [0, 0, 0, 1, 1, 2], [0], [0]>} : vector<2x8x8xbf16>, vector<2x8x8xbf16>, vector<2x8x8xf32> -> vector<2x8x8xf32>
    "tpu.trace_stop"() : () -> ()
    %124 = vector.shape_cast %123 : vector<2x8x8xf32> to vector<16x8xf32>
    %125 = arith.truncf %124 : vector<16x8xf32> to vector<16x8xbf16>
    %126 = vector.extract_strided_slice %28 {offsets = [16, 0], sizes = [8, 32], strides = [1, 1]} : vector<32x32xbf16> to vector<8x32xbf16>
    %cst_35 = arith.constant dense<0.000000e+00> : vector<16x32xf32>
    %127 = tpu.matmul %125, %126, %cst_35 {dimension_numbers = #tpu.dot_dimension_numbers<[1], [0], [0], [1], [0, 0, 1, 1], [], []>} : vector<16x8xbf16>, vector<8x32xbf16>, vector<16x32xf32> -> vector<16x32xf32>
    %128 = arith.addf %95, %127 : vector<16x32xf32>
    %129 = vector.extract_strided_slice %20 {offsets = [0, 24], sizes = [16, 8], strides = [1, 1]} : vector<16x32xf32> to vector<16x8xf32>
    %130 = vector.shape_cast %129 : vector<16x8xf32> to vector<2x8x8xf32>
    %131 = arith.truncf %130 : vector<2x8x8xf32> to vector<2x8x8xbf16>
    %132 = vector.extract_strided_slice %21 {offsets = [0, 24], sizes = [16, 8], strides = [1, 1]} : vector<16x32xf32> to vector<16x8xf32>
    %133 = vector.shape_cast %132 : vector<16x8xf32> to vector<2x8x8xf32>
    %134 = arith.truncf %133 : vector<2x8x8xf32> to vector<2x8x8xbf16>
    %135 = vector.extract_strided_slice %22 {offsets = [0, 24], sizes = [16, 8], strides = [1, 1]} : vector<16x32xf32> to vector<16x8xf32>
    %136 = vector.shape_cast %135 : vector<16x8xf32> to vector<2x8x8xf32>
    %137 = arith.truncf %136 : vector<2x8x8xf32> to vector<2x8x8xbf16>
    "tpu.trace_start"() <{level = 10 : i32, message = "bqd,bkd->bqk"}> : () -> ()
    %cst_36 = arith.constant dense<0.000000e+00> : vector<2x8x8xf32>
    %138 = tpu.matmul %131, %134, %cst_36 {dimension_numbers = #tpu.dot_dimension_numbers<[2], [2], [1], [1], [0, 0, 0, 1, 1, 1], [0], [0]>} : vector<2x8x8xbf16>, vector<2x8x8xbf16>, vector<2x8x8xf32> -> vector<2x8x8xf32>
    "tpu.trace_stop"() : () -> ()
    %cst_37 = arith.constant 0.353553385 : f32
    %139 = vector.broadcast %cst_37 : f32 to vector<2x8x8xf32>
    %140 = arith.mulf %138, %139 : vector<2x8x8xf32>
    %cst_38 = arith.constant -1.000000e+09 : f32
    %141 = vector.shape_cast %26 : vector<2x1x8xi1> to vector<2x1x8xi1>
    %142 = vector.broadcast %141 : vector<2x1x8xi1> to vector<2x8x8xi1>
    %143 = vector.broadcast %cst_38 : f32 to vector<2x8x8xf32>
    %144 = arith.select %142, %140, %143 : vector<2x8x8xi1>, vector<2x8x8xf32>
    %cst_39 = arith.constant dense<0xFF800000> : vector<2x8xf32>
    %145 = vector.multi_reduction <maximumf>, %144, %cst_39 [2] : vector<2x8x8xf32> to vector<2x8xf32>
    %146 = vector.shape_cast %145 : vector<2x8xf32> to vector<2x8x1xf32>
    %147 = vector.broadcast %146 : vector<2x8x1xf32> to vector<2x8x8xf32>
    %148 = arith.subf %144, %147 : vector<2x8x8xf32>
    %149 = math.exp %148 : vector<2x8x8xf32>
    %cst_40 = arith.constant dense<0.000000e+00> : vector<2x8xf32>
    %150 = vector.multi_reduction <add>, %149, %cst_40 [2] : vector<2x8x8xf32> to vector<2x8xf32>
    %151 = vector.shape_cast %150 : vector<2x8xf32> to vector<2x8x1xf32>
    %152 = tpu.reciprocal %151 {approx = true} : vector<2x8x1xf32> -> vector<2x8x1xf32>
    %153 = vector.broadcast %152 : vector<2x8x1xf32> to vector<2x8x8xf32>
    %154 = arith.mulf %149, %153 : vector<2x8x8xf32>
    %155 = arith.truncf %154 : vector<2x8x8xf32> to vector<2x8x8xbf16>
    "tpu.trace_start"() <{level = 10 : i32, message = "bqk,bkd->bqd"}> : () -> ()
    %cst_41 = arith.constant dense<0.000000e+00> : vector<2x8x8xf32>
    %156 = tpu.matmul %155, %137, %cst_41 {dimension_numbers = #tpu.dot_dimension_numbers<[2], [1], [1], [2], [0, 0, 0, 1, 1, 2], [0], [0]>} : vector<2x8x8xbf16>, vector<2x8x8xbf16>, vector<2x8x8xf32> -> vector<2x8x8xf32>
    "tpu.trace_stop"() : () -> ()
    %157 = vector.shape_cast %156 : vector<2x8x8xf32> to vector<16x8xf32>
    %158 = arith.truncf %157 : vector<16x8xf32> to vector<16x8xbf16>
    %159 = vector.extract_strided_slice %28 {offsets = [24, 0], sizes = [8, 32], strides = [1, 1]} : vector<32x32xbf16> to vector<8x32xbf16>
    %cst_42 = arith.constant dense<0.000000e+00> : vector<16x32xf32>
    %160 = tpu.matmul %158, %159, %cst_42 {dimension_numbers = #tpu.dot_dimension_numbers<[1], [0], [0], [1], [0, 0, 1, 1], [], []>} : vector<16x8xbf16>, vector<8x32xbf16>, vector<16x32xf32> -> vector<16x32xf32>
    %161 = arith.addf %128, %160 : vector<16x32xf32>
    %162 = vector.broadcast %9 : vector<1x32xf32> to vector<16x32xf32>
    %163 = arith.addf %161, %162 : vector<16x32xf32>
    %164 = arith.addf %163, %3 : vector<16x32xf32>
    %cst_43 = arith.constant dense<0.000000e+00> : vector<16xf32>
    %165 = vector.multi_reduction <add>, %164, %cst_43 [1] : vector<16x32xf32> to vector<16xf32>
    %166 = vector.shape_cast %165 : vector<16xf32> to vector<16x1xf32>
    %cst_44 = arith.constant 3.200000e+01 : f32
    %167 = vector.broadcast %cst_44 : f32 to vector<16x1xf32>
    %168 = arith.divf %166, %167 : vector<16x1xf32>
    %169 = vector.broadcast %168 : vector<16x1xf32> to vector<16x32xf32>
    %170 = arith.subf %164, %169 : vector<16x32xf32>
    %171 = arith.mulf %170, %170 : vector<16x32xf32>
    %cst_45 = arith.constant dense<0.000000e+00> : vector<16xf32>
    %172 = vector.multi_reduction <add>, %171, %cst_45 [1] : vector<16x32xf32> to vector<16xf32>
    %173 = vector.shape_cast %172 : vector<16xf32> to vector<16x1xf32>
    %cst_46 = arith.constant 3.200000e+01 : f32
    %174 = vector.broadcast %cst_46 : f32 to vector<16x1xf32>
    %175 = arith.divf %173, %174 : vector<16x1xf32>
    %176 = vector.broadcast %168 : vector<16x1xf32> to vector<16x32xf32>
    %177 = arith.subf %164, %176 : vector<16x32xf32>
    %cst_47 = arith.constant 9.99999974E-6 : f32
    %178 = vector.broadcast %cst_47 : f32 to vector<16x1xf32>
    %179 = arith.addf %175, %178 : vector<16x1xf32>
    %180 = math.rsqrt %179 : vector<16x1xf32>
    %181 = vector.broadcast %180 : vector<16x1xf32> to vector<16x32xf32>
    %182 = arith.mulf %177, %181 : vector<16x32xf32>
    %183 = vector.broadcast %11 : vector<1x32xf32> to vector<16x32xf32>
    %184 = arith.mulf %182, %183 : vector<16x32xf32>
    %185 = vector.broadcast %12 : vector<1x32xf32> to vector<16x32xf32>
    %186 = arith.addf %184, %185 : vector<16x32xf32>
    %187 = arith.truncf %186 : vector<16x32xf32> to vector<16x32xbf16>
    %c0_48 = arith.constant 0 : index
    %c0_49 = arith.constant 0 : index
    %c0_50 = arith.constant 0 : index
    %188 = vector.load %arg5[%c0_48, %c0_49, %c0_50] : memref<1x32x128xbf16, #tpu.memory_space<vmem>>, vector<1x32x128xbf16>
    %189 = vector.shape_cast %188 : vector<1x32x128xbf16> to vector<32x128xbf16>
    %cst_51 = arith.constant dense<0.000000e+00> : vector<16x128xf32>
    %190 = tpu.matmul %187, %189, %cst_51 {dimension_numbers = #tpu.dot_dimension_numbers<[1], [0], [0], [1], [0, 0, 1, 1], [], []>} : vector<16x32xbf16>, vector<32x128xbf16>, vector<16x128xf32> -> vector<16x128xf32>
    %191 = vector.broadcast %8 : vector<1x128xf32> to vector<16x128xf32>
    %192 = arith.addf %190, %191 : vector<16x128xf32>
    %193 = arith.mulf %192, %192 : vector<16x128xf32>
    %194 = arith.mulf %192, %193 : vector<16x128xf32>
    %cst_52 = arith.constant 4.471500e-02 : f32
    %195 = vector.broadcast %cst_52 : f32 to vector<16x128xf32>
    %196 = arith.mulf %195, %194 : vector<16x128xf32>
    %197 = arith.addf %192, %196 : vector<16x128xf32>
    %cst_53 = arith.constant 0.797884583 : f32
    %198 = vector.broadcast %cst_53 : f32 to vector<16x128xf32>
    %199 = arith.mulf %198, %197 : vector<16x128xf32>
    %200 = math.tanh %199 : vector<16x128xf32>
    %cst_54 = arith.constant 1.000000e+00 : f32
    %201 = vector.broadcast %cst_54 : f32 to vector<16x128xf32>
    %202 = arith.addf %201, %200 : vector<16x128xf32>
    %cst_55 = arith.constant 5.000000e-01 : f32
    %203 = vector.broadcast %cst_55 : f32 to vector<16x128xf32>
    %204 = arith.mulf %203, %202 : vector<16x128xf32>
    %205 = arith.mulf %192, %204 : vector<16x128xf32>
    %206 = arith.truncf %205 : vector<16x128xf32> to vector<16x128xbf16>
    %c0_56 = arith.constant 0 : index
    %c0_57 = arith.constant 0 : index
    %c0_58 = arith.constant 0 : index
    %207 = vector.load %arg6[%c0_56, %c0_57, %c0_58] : memref<1x128x32xbf16, #tpu.memory_space<vmem>>, vector<1x128x32xbf16>
    %208 = vector.shape_cast %207 : vector<1x128x32xbf16> to vector<128x32xbf16>
    %cst_59 = arith.constant dense<0.000000e+00> : vector<16x32xf32>
    %209 = tpu.matmul %206, %208, %cst_59 {dimension_numbers = #tpu.dot_dimension_numbers<[1], [0], [0], [1], [0, 0, 1, 1], [], []>} : vector<16x128xbf16>, vector<128x32xbf16>, vector<16x32xf32> -> vector<16x32xf32>
    %210 = vector.broadcast %10 : vector<1x32xf32> to vector<16x32xf32>
    %211 = arith.addf %209, %210 : vector<16x32xf32>
    %212 = arith.addf %211, %186 : vector<16x32xf32>
    %cst_60 = arith.constant dense<0.000000e+00> : vector<16xf32>
    %213 = vector.multi_reduction <add>, %212, %cst_60 [1] : vector<16x32xf32> to vector<16xf32>
    %214 = vector.shape_cast %213 : vector<16xf32> to vector<16x1xf32>
    %cst_61 = arith.constant 3.200000e+01 : f32
    %215 = vector.broadcast %cst_61 : f32 to vector<16x1xf32>
    %216 = arith.divf %214, %215 : vector<16x1xf32>
    %217 = vector.broadcast %216 : vector<16x1xf32> to vector<16x32xf32>
    %218 = arith.subf %212, %217 : vector<16x32xf32>
    %219 = arith.mulf %218, %218 : vector<16x32xf32>
    %cst_62 = arith.constant dense<0.000000e+00> : vector<16xf32>
    %220 = vector.multi_reduction <add>, %219, %cst_62 [1] : vector<16x32xf32> to vector<16xf32>
    %221 = vector.shape_cast %220 : vector<16xf32> to vector<16x1xf32>
    %cst_63 = arith.constant 3.200000e+01 : f32
    %222 = vector.broadcast %cst_63 : f32 to vector<16x1xf32>
    %223 = arith.divf %221, %222 : vector<16x1xf32>
    %224 = vector.broadcast %216 : vector<16x1xf32> to vector<16x32xf32>
    %225 = arith.subf %212, %224 : vector<16x32xf32>
    %cst_64 = arith.constant 9.99999974E-6 : f32
    %226 = vector.broadcast %cst_64 : f32 to vector<16x1xf32>
    %227 = arith.addf %223, %226 : vector<16x1xf32>
    %228 = math.rsqrt %227 : vector<16x1xf32>
    %229 = vector.broadcast %228 : vector<16x1xf32> to vector<16x32xf32>
    %230 = arith.mulf %225, %229 : vector<16x32xf32>
    %231 = vector.broadcast %13 : vector<1x32xf32> to vector<16x32xf32>
    %232 = arith.mulf %230, %231 : vector<16x32xf32>
    %233 = vector.broadcast %14 : vector<1x32xf32> to vector<16x32xf32>
    %234 = arith.addf %232, %233 : vector<16x32xf32>
    %c0_65 = arith.constant 0 : index
    %c0_66 = arith.constant 0 : index
    %235 = vector.load %arg12[%c0_65, %c0_66] : memref<16x32xf32, #tpu.memory_space<vmem>>, vector<16x32xf32>
    tpu.vector_store %arg12[%c0_65, %c0_66], %234 {strides = array<i32>} : memref<16x32xf32, #tpu.memory_space<vmem>>, vector<16x32xf32>,
    %c1_i32 = arith.constant 1 : i32
    %236 = arith.cmpi eq, %arg0, %c1_i32 : i32
    %237 = arith.extui %236 : i1 to i32
    %c0_i32_67 = arith.constant 0 : i32
    %238 = arith.cmpi ne, %237, %c0_i32_67 : i32
    scf.if %238 {
      %239 = arith.truncf %234 : vector<16x32xf32> to vector<16x32xbf16>
      %c0_68 = arith.constant 0 : index
      %c0_69 = arith.constant 0 : index
      %c0_70 = arith.constant 0 : index
      %240 = vector.load %arg8[%c0_68, %c0_69, %c0_70] : memref<2x32x128xbf16, #tpu.memory_space<vmem>>, vector<1x32x128xbf16>
      %241 = vector.shape_cast %240 : vector<1x32x128xbf16> to vector<32x128xbf16>
      %cst_71 = arith.constant dense<0.000000e+00> : vector<16x128xf32>
      %242 = tpu.matmul %239, %241, %cst_71 {dimension_numbers = #tpu.dot_dimension_numbers<[1], [0], [0], [1], [0, 0, 1, 1], [], []>} : vector<16x32xbf16>, vector<32x128xbf16>, vector<16x128xf32> -> vector<16x128xf32>
      %c0_72 = arith.constant 0 : index
      %c0_73 = arith.constant 0 : index
      %243 = vector.load %arg9[%c0_72, %c0_73] : memref<2x128xf32, #tpu.memory_space<vmem>>, vector<1x128xf32>
      %244 = vector.broadcast %243 : vector<1x128xf32> to vector<16x128xf32>
      %245 = arith.addf %242, %244 : vector<16x128xf32>
      %cst_74 = arith.constant dense<0xFF800000> : vector<16xf32>
      %246 = vector.multi_reduction <maximumf>, %245, %cst_74 [1] : vector<16x128xf32> to vector<16xf32>
      %247 = vector.shape_cast %246 : vector<16xf32> to vector<16x1xf32>
      %248 = vector.broadcast %247 : vector<16x1xf32> to vector<16x128xf32>
      %249 = arith.subf %245, %248 : vector<16x128xf32>
      %250 = math.exp %249 : vector<16x128xf32>
      %cst_75 = arith.constant dense<0.000000e+00> : vector<16xf32>
      %251 = vector.multi_reduction <add>, %250, %cst_75 [1] : vector<16x128xf32> to vector<16xf32>
      %252 = vector.shape_cast %251 : vector<16xf32> to vector<16x1xf32>
      %253 = math.log %252 : vector<16x1xf32>
      %254 = vector.broadcast %253 : vector<16x1xf32> to vector<16x128xf32>
      %255 = arith.subf %249, %254 : vector<16x128xf32>
      %c0_76 = arith.constant 0 : index
      %c0_77 = arith.constant 0 : index
      %256 = vector.load %arg11[%c0_76, %c0_77] : memref<16x128xf32, #tpu.memory_space<vmem>>, vector<16x128xf32>
      tpu.vector_store %arg11[%c0_76, %c0_77], %255 {strides = array<i32>} : memref<16x128xf32, #tpu.memory_space<vmem>>, vector<16x128xf32>,
      %257 = vector.shape_cast %234 : vector<16x32xf32> to vector<2x8x32xf32>
      %258 = vector.extract_strided_slice %257 {offsets = [0, 0, 0], sizes = [2, 1, 32], strides = [1, 1, 1]} : vector<2x8x32xf32> to vector<2x1x32xf32>
      %259 = vector.shape_cast %258 : vector<2x1x32xf32> to vector<2x32xf32>
      %260 = arith.truncf %259 : vector<2x32xf32> to vector<2x32xbf16>
      %c1 = arith.constant 1 : index
      %c0_78 = arith.constant 0 : index
      %c0_79 = arith.constant 0 : index
      %261 = vector.load %arg8[%c1, %c0_78, %c0_79] : memref<2x32x128xbf16, #tpu.memory_space<vmem>>, vector<1x32x128xbf16>
      %262 = vector.shape_cast %261 : vector<1x32x128xbf16> to vector<32x128xbf16>
      %cst_80 = arith.constant dense<0.000000e+00> : vector<2x128xf32>
      %263 = tpu.matmul %260, %262, %cst_80 {dimension_numbers = #tpu.dot_dimension_numbers<[1], [0], [0], [1], [0, 0, 1, 1], [], []>} : vector<2x32xbf16>, vector<32x128xbf16>, vector<2x128xf32> -> vector<2x128xf32>
      %c1_81 = arith.constant 1 : index
      %c0_82 = arith.constant 0 : index
      %264 = vector.load %arg9[%c1_81, %c0_82] : memref<2x128xf32, #tpu.memory_space<vmem>>, vector<1x128xf32>
      %265 = vector.broadcast %264 : vector<1x128xf32> to vector<2x128xf32>
      %266 = arith.addf %263, %265 : vector<2x128xf32>
      %cst_83 = arith.constant dense<0xFF800000> : vector<2xf32>
      %267 = vector.multi_reduction <maximumf>, %266, %cst_83 [1] : vector<2x128xf32> to vector<2xf32>
      %268 = vector.shape_cast %267 : vector<2xf32> to vector<2x1xf32>
      %269 = vector.broadcast %268 : vector<2x1xf32> to vector<2x128xf32>
      %270 = arith.subf %266, %269 : vector<2x128xf32>
      %271 = math.exp %270 : vector<2x128xf32>
      %cst_84 = arith.constant dense<0.000000e+00> : vector<2xf32>
      %272 = vector.multi_reduction <add>, %271, %cst_84 [1] : vector<2x128xf32> to vector<2xf32>
      %273 = vector.shape_cast %272 : vector<2xf32> to vector<2x1xf32>
      %274 = math.log %273 : vector<2x1xf32>
      %275 = vector.broadcast %274 : vector<2x1xf32> to vector<2x128xf32>
      %276 = arith.subf %270, %275 : vector<2x128xf32>
      %c0_85 = arith.constant 0 : index
      %c0_86 = arith.constant 0 : index
      %277 = vector.load %arg10[%c0_85, %c0_86] : memref<2x128xf32, #tpu.memory_space<vmem>>, vector<2x128xf32>
      tpu.vector_store %arg10[%c0_85, %c0_86], %276 {strides = array<i32>} : memref<2x128xf32, #tpu.memory_space<vmem>>, vector<2x128xf32>,
    } else {
    }
    return
  }
  func.func @transform_0(%arg0: i32) -> (i32, i32) {
    %c0_i32 = arith.constant 0 : i32
    %c0_i32_0 = arith.constant 0 : i32
    %c0_i32_1 = arith.constant 0 : i32
    return %c0_i32, %c0_i32_0 : i32, i32
  }
  func.func @transform_1(%arg0: i32) -> (i32, i32) {
    %c0_i32 = arith.constant 0 : i32
    %c0_i32_0 = arith.constant 0 : i32
    %c0_i32_1 = arith.constant 0 : i32
    return %c0_i32, %c0_i32_0 : i32, i32
  }
  func.func @transform_2(%arg0: i32) -> (i32, i32, i32) {
    %c0_i32 = arith.constant 0 : i32
    %c0_i32_0 = arith.constant 0 : i32
    %c0_i32_1 = arith.constant 0 : i32
    return %arg0, %c0_i32, %c0_i32_0 : i32, i32, i32
  }
  func.func @transform_3(%arg0: i32) -> (i32, i32, i32) {
    %c0_i32 = arith.constant 0 : i32
    %c0_i32_0 = arith.constant 0 : i32
    %c0_i32_1 = arith.constant 0 : i32
    return %arg0, %c0_i32, %c0_i32_0 : i32, i32, i32
  }
  func.func @transform_4(%arg0: i32) -> (i32, i32, i32) {
    %c0_i32 = arith.constant 0 : i32
    %c0_i32_0 = arith.constant 0 : i32
    %c0_i32_1 = arith.constant 0 : i32
    return %arg0, %c0_i32, %c0_i32_0 : i32, i32, i32
  }
  func.func @transform_5(%arg0: i32) -> (i32, i32, i32) {
    %c0_i32 = arith.constant 0 : i32
    %c0_i32_0 = arith.constant 0 : i32
    %c0_i32_1 = arith.constant 0 : i32
    return %arg0, %c0_i32, %c0_i32_0 : i32, i32, i32
  }
  func.func @transform_6(%arg0: i32) -> (i32, i32, i32) {
    %c0_i32 = arith.constant 0 : i32
    %c0_i32_0 = arith.constant 0 : i32
    %c0_i32_1 = arith.constant 0 : i32
    return %arg0, %c0_i32, %c0_i32_0 : i32, i32, i32
  }
  func.func @transform_7(%arg0: i32) -> (i32, i32, i32) {
    %c0_i32 = arith.constant 0 : i32
    %c0_i32_0 = arith.constant 0 : i32
    %c0_i32_1 = arith.constant 0 : i32
    %c0_i32_2 = arith.constant 0 : i32
    return %c0_i32, %c0_i32_0, %c0_i32_1 : i32, i32, i32
  }
  func.func @transform_8(%arg0: i32) -> (i32, i32) {
    %c0_i32 = arith.constant 0 : i32
    %c0_i32_0 = arith.constant 0 : i32
    %c0_i32_1 = arith.constant 0 : i32
    return %c0_i32, %c0_i32_0 : i32, i32
  }
  func.func @transform_9(%arg0: i32) -> (i32, i32) {
    %c0_i32 = arith.constant 0 : i32
    %c0_i32_0 = arith.constant 0 : i32
    %c0_i32_1 = arith.constant 0 : i32
    return %c0_i32, %c0_i32_0 : i32, i32
  }
  func.func @transform_10(%arg0: i32) -> (i32, i32) {
    %c0_i32 = arith.constant 0 : i32
    %c0_i32_0 = arith.constant 0 : i32
    %c0_i32_1 = arith.constant 0 : i32
    return %c0_i32, %c0_i32_0 : i32, i32
  }
}

</mosaic_0001>

<llo_original>
// kernel: bert_lm_forward.1
$region0: #{bert_lm_forward.1}
  #allocation0 [shape = 'u32[]', space=smem, size = 0x4, offset = 0x4, fixed_abs, tag = 'smem constant byte address 0x4 - core index']
  #allocation1 [shape = 'u32[144,128]{1,0:T(1,128)}', space=vmem, size = 0x12000, scoped, tag = 'internal scratch']
  #allocation2 [shape = 'f32[16,32]{1,0:T(8,128)}', space=vmem, size = 0x2000, scoped, tag = 'scratch operand']
  %s0 = inlined_call_operand.vmem [shape: f32[2,8], index: 0, kind: input, shape index: {}]
  %s1 = inlined_call_operand.vmem [shape: f32[16,32], index: 1, kind: input, shape index: {}]
  %s2 = inlined_call_operand.vmem [shape: bf16[2,32,96], index: 2, kind: input, shape index: {}]
  %s3 = inlined_call_operand.vmem [shape: bf16[2,32,32], index: 3, kind: input, shape index: {}]
  %s4 = inlined_call_operand.vmem [shape: bf16[2,32,128], index: 4, kind: input, shape index: {}]
  %s5 = inlined_call_operand.vmem [shape: bf16[2,128,32], index: 5, kind: input, shape index: {}]
  %s6 = inlined_call_operand.vmem [shape: f32[2,4,128], index: 6, kind: input, shape index: {}]
  %s7 = inlined_call_operand.vmem [shape: bf16[2,32,128], index: 7, kind: input, shape index: {}]
  %s8 = inlined_call_operand.vmem [shape: f32[2,128], index: 8, kind: input, shape index: {}]
  %s9 = inlined_call_operand.hbm [shape: f32[2,128], index: 9, kind: output, shape index: {0}]
  %s10 = inlined_call_operand.hbm [shape: f32[16,128], index: 10, kind: output, shape index: {1}]
  %11 = xla_tuple %s9, %s10
  %s12 = sld [smem:[#allocation0]]
  $region85: #{bert_lm_forward.1} parent=0
    _
  %s14 = ssub.s32 1, %s12
  %s15 = scalar_select 0, %s14, %s12
  $region1: #{bert_lm_forward.1} parent=0
    #allocation3 [shape = 'u8[1024]{0}', space=vmem, size = 0x400, scoped, tag = 'output window, operand 0, single buffered']
    #allocation4 [shape = 's32[2]{0}', space=sflag, size = 0x8, scoped, tag = 'scoped memory for bert_lm_forward.1']
    #allocation5 [shape = 'u8[8192]{0}', space=vmem, size = 0x2000, scoped, tag = 'output window, operand 1, single buffered']
    #allocation6 [shape = 's32[1]{0}', space=sflag, size = 0x4, scoped, tag = 'scoped memory for bert_lm_forward.1']
    %16 = vsyncpa [#allocation4], 0
    %17 = vsyncpa [#allocation6], 0
    loop: start=0, step=1, limit=4
    $region2: #{bert_lm_forward.1} parent=1 // loop_pre_header
      _
    $region3: #{bert_lm_forward.1} parent=1 // loop_header
      %s19 = sphi 0, %s23
      %p20 = scmp.ge.s32.totalorder %s19, 4
      %s27 = sphi 0, %s27
      %s29 = sphi 0, %s27
      %s30 = sphi 0, %s29
      %s44 = sphi 0, %s30
      %s48 = sphi 0, %s48
      %s50 = sphi 0, %s48
      %s51 = sphi 0, %s50
      %s65 = sphi 0, %s51
      %s71 = sphi 0, %s73
      %s74 = sphi 0, %s71
      %s75 = sphi 0, %s74
      %s91 = sphi 0, %s75
      %s97 = sphi 0, %s99
      %s100 = sphi 0, %s97
      %s101 = sphi 0, %s100
      %s117 = sphi 0, %s101
      %s123 = sphi 0, %s125
      %s126 = sphi 0, %s123
      %s127 = sphi 0, %s126
      %s143 = sphi 0, %s127
      %s149 = sphi 0, %s151
      %s152 = sphi 0, %s149
      %s153 = sphi 0, %s152
      %s169 = sphi 0, %s153
      %s175 = sphi 0, %s177
      %s178 = sphi 0, %s175
      %s179 = sphi 0, %s178
      %s195 = sphi 0, %s179
      %s199 = sphi 0, %s199
      %s201 = sphi 0, %s199
      %s202 = sphi 0, %s201
      %s216 = sphi 0, %s202
      %s220 = sphi 0, %s220
      %s222 = sphi 0, %s220
      %s223 = sphi 0, %s222
      %s237 = sphi 0, %s223
      %s241 = sphi 0, %s241
      %s243 = sphi 0, %s241
      %s244 = sphi 0, %s243
      %s258 = sphi 0, %s244
      %s262 = sphi 0, %s262
      %s264 = sphi 0, %s262
      %s265 = sphi 0, %s264
      %s279 = sphi 0, %s265
    $region4: #{bert_lm_forward.1} parent=1 // loop_header_branch
      %22 = sbr.rel (%p20) target = $region8
    $region5: #{bert_lm_forward.1} parent=1 // loop_body
      %s24 = ssub.s32 %s19, 1
      %s25 = ssub.s32 %s19, 2
      %s26 = sadd.s32 %s19, 1
      %s28 = sadd.s32 %s27, 1
      %p31 = scmp.eq.s32.totalorder %s19, 1
      %p32 = scmp.ne.s32.totalorder %s27, %s29
      %p33 = scmp.eq.s32.totalorder %s19, 0
      %p34 = por %p32, %p33
      %p35 = scmp.ne.s32.totalorder %s27, %s29
      %p36 = scmp.eq.s32.totalorder %s24, 1
      %p37 = por %p35, %p36
      %p38 = scmp.ne.s32.totalorder %s29, %s30
      %p39 = scmp.eq.s32.totalorder %s24, 0
      %p40 = por %p38, %p39
      %p41 = scmp.ne.s32.totalorder %s29, %s30
      %p42 = scmp.eq.s32.totalorder %s25, 1
      %p43 = por %p41, %p42
      %p45 = scmp.ne.s32.totalorder %s30, %s44
      %p46 = scmp.eq.s32.totalorder %s25, 0
      %p47 = por %p45, %p46
      %s49 = sadd.s32 %s48, 1
      %p52 = scmp.eq.s32.totalorder %s19, 1
      %p53 = scmp.ne.s32.totalorder %s48, %s50
      %p54 = scmp.eq.s32.totalorder %s19, 0
      %p55 = por %p53, %p54
      %p56 = scmp.ne.s32.totalorder %s48, %s50
      %p57 = scmp.eq.s32.totalorder %s24, 1
      %p58 = por %p56, %p57
      %p59 = scmp.ne.s32.totalorder %s50, %s51
      %p60 = scmp.eq.s32.totalorder %s24, 0
      %p61 = por %p59, %p60
      %p62 = scmp.ne.s32.totalorder %s50, %s51
      %p63 = scmp.eq.s32.totalorder %s25, 1
      %p64 = por %p62, %p63
      %p66 = scmp.ne.s32.totalorder %s51, %s65
      %p67 = scmp.eq.s32.totalorder %s25, 0
      %p68 = por %p66, %p67
      %s69 = ssub.s32 %s19, %s26
      %p70 = scmp.eq.s32.totalorder %s69, 0
      %s72 = sadd.s32 %s71, 1
      %s73 = scalar_select %p70, %s71, %s72
      %p76 = pneg %p70
      %p77 = scmp.eq.s32.totalorder %s19, 1
      %p78 = por %p76, %p77
      %p79 = scmp.ne.s32.totalorder %s71, %s74
      %p80 = scmp.eq.s32.totalorder %s19, 0
      %p81 = por %p79, %p80
      %p82 = scmp.ne.s32.totalorder %s71, %s74
      %p83 = scmp.eq.s32.totalorder %s24, 1
      %p84 = por %p82, %p83
      %p85 = scmp.ne.s32.totalorder %s74, %s75
      %p86 = scmp.eq.s32.totalorder %s24, 0
      %p87 = por %p85, %p86
      %p88 = scmp.ne.s32.totalorder %s74, %s75
      %p89 = scmp.eq.s32.totalorder %s25, 1
      %p90 = por %p88, %p89
      %p92 = scmp.ne.s32.totalorder %s75, %s91
      %p93 = scmp.eq.s32.totalorder %s25, 0
      %p94 = por %p92, %p93
      %s95 = ssub.s32 %s19, %s26
      %p96 = scmp.eq.s32.totalorder %s95, 0
      %s98 = sadd.s32 %s97, 1
      %s99 = scalar_select %p96, %s97, %s98
      %p102 = pneg %p96
      %p103 = scmp.eq.s32.totalorder %s19, 1
      %p104 = por %p102, %p103
      %p105 = scmp.ne.s32.totalorder %s97, %s100
      %p106 = scmp.eq.s32.totalorder %s19, 0
      %p107 = por %p105, %p106
      %p108 = scmp.ne.s32.totalorder %s97, %s100
      %p109 = scmp.eq.s32.totalorder %s24, 1
      %p110 = por %p108, %p109
      %p111 = scmp.ne.s32.totalorder %s100, %s101
      %p112 = scmp.eq.s32.totalorder %s24, 0
      %p113 = por %p111, %p112
      %p114 = scmp.ne.s32.totalorder %s100, %s101
      %p115 = scmp.eq.s32.totalorder %s25, 1
      %p116 = por %p114, %p115
      %p118 = scmp.ne.s32.totalorder %s101, %s117
      %p119 = scmp.eq.s32.totalorder %s25, 0
      %p120 = por %p118, %p119
      %s121 = ssub.s32 %s19, %s26
      %p122 = scmp.eq.s32.totalorder %s121, 0
      %s124 = sadd.s32 %s123, 1
      %s125 = scalar_select %p122, %s123, %s124
      %p128 = pneg %p122
      %p129 = scmp.eq.s32.totalorder %s19, 1
      %p130 = por %p128, %p129
      %p131 = scmp.ne.s32.totalorder %s123, %s126
      %p132 = scmp.eq.s32.totalorder %s19, 0
      %p133 = por %p131, %p132
      %p134 = scmp.ne.s32.totalorder %s123, %s126
      %p135 = scmp.eq.s32.totalorder %s24, 1
      %p136 = por %p134, %p135
      %p137 = scmp.ne.s32.totalorder %s126, %s127
      %p138 = scmp.eq.s32.totalorder %s24, 0
      %p139 = por %p137, %p138
      %p140 = scmp.ne.s32.totalorder %s126, %s127
      %p141 = scmp.eq.s32.totalorder %s25, 1
      %p142 = por %p140, %p141
      %p144 = scmp.ne.s32.totalorder %s127, %s143
      %p145 = scmp.eq.s32.totalorder %s25, 0
      %p146 = por %p144, %p145
      %s147 = ssub.s32 %s19, %s26
      %p148 = scmp.eq.s32.totalorder %s147, 0
      %s150 = sadd.s32 %s149, 1
      %s151 = scalar_select %p148, %s149, %s150
      %p154 = pneg %p148
      %p155 = scmp.eq.s32.totalorder %s19, 1
      %p156 = por %p154, %p155
      %p157 = scmp.ne.s32.totalorder %s149, %s152
      %p158 = scmp.eq.s32.totalorder %s19, 0
      %p159 = por %p157, %p158
      %p160 = scmp.ne.s32.totalorder %s149, %s152
      %p161 = scmp.eq.s32.totalorder %s24, 1
      %p162 = por %p160, %p161
      %p163 = scmp.ne.s32.totalorder %s152, %s153
      %p164 = scmp.eq.s32.totalorder %s24, 0
      %p165 = por %p163, %p164
      %p166 = scmp.ne.s32.totalorder %s152, %s153
      %p167 = scmp.eq.s32.totalorder %s25, 1
      %p168 = por %p166, %p167
      %p170 = scmp.ne.s32.totalorder %s153, %s169
      %p171 = scmp.eq.s32.totalorder %s25, 0
      %p172 = por %p170, %p171
      %s173 = ssub.s32 %s19, %s26
      %p174 = scmp.eq.s32.totalorder %s173, 0
      %s176 = sadd.s32 %s175, 1
      %s177 = scalar_select %p174, %s175, %s176
      %p180 = pneg %p174
      %p181 = scmp.eq.s32.totalorder %s19, 1
      %p182 = por %p180, %p181
      %p183 = scmp.ne.s32.totalorder %s175, %s178
      %p184 = scmp.eq.s32.totalorder %s19, 0
      %p185 = por %p183, %p184
      %p186 = scmp.ne.s32.totalorder %s175, %s178
      %p187 = scmp.eq.s32.totalorder %s24, 1
      %p188 = por %p186, %p187
      %p189 = scmp.ne.s32.totalorder %s178, %s179
      %p190 = scmp.eq.s32.totalorder %s24, 0
      %p191 = por %p189, %p190
      %p192 = scmp.ne.s32.totalorder %s178, %s179
      %p193 = scmp.eq.s32.totalorder %s25, 1
      %p194 = por %p192, %p193
      %p196 = scmp.ne.s32.totalorder %s179, %s195
      %p197 = scmp.eq.s32.totalorder %s25, 0
      %p198 = por %p196, %p197
      %s200 = sadd.s32 %s199, 1
      %p203 = scmp.eq.s32.totalorder %s19, 1
      %p204 = scmp.ne.s32.totalorder %s199, %s201
      %p205 = scmp.eq.s32.totalorder %s19, 0
      %p206 = por %p204, %p205
      %p207 = scmp.ne.s32.totalorder %s199, %s201
      %p208 = scmp.eq.s32.totalorder %s24, 1
      %p209 = por %p207, %p208
      %p210 = scmp.ne.s32.totalorder %s201, %s202
      %p211 = scmp.eq.s32.totalorder %s24, 0
      %p212 = por %p210, %p211
      %p213 = scmp.ne.s32.totalorder %s201, %s202
      %p214 = scmp.eq.s32.totalorder %s25, 1
      %p215 = por %p213, %p214
      %p217 = scmp.ne.s32.totalorder %s202, %s216
      %p218 = scmp.eq.s32.totalorder %s25, 0
      %p219 = por %p217, %p218
      %s221 = sadd.s32 %s220, 1
      %p224 = scmp.eq.s32.totalorder %s19, 1
      %p225 = scmp.ne.s32.totalorder %s220, %s222
      %p226 = scmp.eq.s32.totalorder %s19, 0
      %p227 = por %p225, %p226
      %p228 = scmp.ne.s32.totalorder %s220, %s222
      %p229 = scmp.eq.s32.totalorder %s24, 1
      %p230 = por %p228, %p229
      %p231 = scmp.ne.s32.totalorder %s222, %s223
      %p232 = scmp.eq.s32.totalorder %s24, 0
      %p233 = por %p231, %p232
      %p234 = scmp.ne.s32.totalorder %s222, %s223
      %p235 = scmp.eq.s32.totalorder %s25, 1
      %p236 = por %p234, %p235
      %p238 = scmp.ne.s32.totalorder %s223, %s237
      %p239 = scmp.eq.s32.totalorder %s25, 0
      %p240 = por %p238, %p239
      %s242 = sadd.s32 %s241, 1
      %p245 = scmp.eq.s32.totalorder %s19, 1
      %p246 = scmp.ne.s32.totalorder %s241, %s243
      %p247 = scmp.eq.s32.totalorder %s19, 0
      %p248 = por %p246, %p247
      %p249 = scmp.ne.s32.totalorder %s241, %s243
      %p250 = scmp.eq.s32.totalorder %s24, 1
      %p251 = por %p249, %p250
      %p252 = scmp.ne.s32.totalorder %s243, %s244
      %p253 = scmp.eq.s32.totalorder %s24, 0
      %p254 = por %p252, %p253
      %p255 = scmp.ne.s32.totalorder %s243, %s244
      %p256 = scmp.eq.s32.totalorder %s25, 1
      %p257 = por %p255, %p256
      %p259 = scmp.ne.s32.totalorder %s244, %s258
      %p260 = scmp.eq.s32.totalorder %s25, 0
      %p261 = por %p259, %p260
      %s263 = sadd.s32 %s262, 1
      %p266 = scmp.eq.s32.totalorder %s19, 1
      %p267 = scmp.ne.s32.totalorder %s262, %s264
      %p268 = scmp.eq.s32.totalorder %s19, 0
      %p269 = por %p267, %p268
      %p270 = scmp.ne.s32.totalorder %s262, %s264
      %p271 = scmp.eq.s32.totalorder %s24, 1
      %p272 = por %p270, %p271
      %p273 = scmp.ne.s32.totalorder %s264, %s265
      %p274 = scmp.eq.s32.totalorder %s24, 0
      %p275 = por %p273, %p274
      %p276 = scmp.ne.s32.totalorder %s264, %s265
      %p277 = scmp.eq.s32.totalorder %s25, 1
      %p278 = por %p276, %p277
      %p280 = scmp.ne.s32.totalorder %s265, %s279
      %p281 = scmp.eq.s32.totalorder %s25, 0
      %p282 = por %p280, %p281
      %p283 = scmp.le.s32.totalorder 1, %s19
      %p284 = scmp.lt.s32.totalorder %s19, 3
      %p285 = pnand %p283, %p284
      %p286 = pneg %p285
      // Predicated region
      $region9: #{bert_lm_forward.1} parent=5 // pred_check
        _
      $region10: #{bert_lm_forward.1} parent=5 // pred_check_branch
        %288 = sbr.rel (%p285) target = $region12
      $region11: #{bert_lm_forward.1} parent=5 // pred_region
        %s289 = ssub.s32 %s19, 1
        // Predicated region
        $region13: #{bert_lm_forward.1} parent=11 // pred_check
          %p290 = pneg %p40
        $region14: #{bert_lm_forward.1} parent=11 // pred_check_branch
          %292 = sbr.rel (%p290) target = $region16
        $region15: #{bert_lm_forward.1} parent=11 // pred_region
          _
        $region16: #{bert_lm_forward.1} parent=11 // pred_fallthru
          _
        // Predicated region
        $region17: #{bert_lm_forward.1} parent=11 // pred_check
          %p293 = pneg %p61
        $region18: #{bert_lm_forward.1} parent=11 // pred_check_branch
          %295 = sbr.rel (%p293) target = $region20
        $region19: #{bert_lm_forward.1} parent=11 // pred_region
          _
        $region20: #{bert_lm_forward.1} parent=11 // pred_fallthru
          _
        // Predicated region
        $region21: #{bert_lm_forward.1} parent=11 // pred_check
          %p296 = pneg %p212
        $region22: #{bert_lm_forward.1} parent=11 // pred_check_branch
          %298 = sbr.rel (%p296) target = $region24
        $region23: #{bert_lm_forward.1} parent=11 // pred_region
          _
        $region24: #{bert_lm_forward.1} parent=11 // pred_fallthru
          _
        // Predicated region
        $region25: #{bert_lm_forward.1} parent=11 // pred_check
          %p299 = pneg %p233
        $region26: #{bert_lm_forward.1} parent=11 // pred_check_branch
          %301 = sbr.rel (%p299) target = $region28
        $region27: #{bert_lm_forward.1} parent=11 // pred_region
          _
        $region28: #{bert_lm_forward.1} parent=11 // pred_fallthru
          _
      $region12: #{bert_lm_forward.1} parent=5 // pred_fallthru
        _
      %p302 = scmp.lt.s32.totalorder %s19, 2
      // Predicated region
      $region29: #{bert_lm_forward.1} parent=5 // pred_check
        %p303 = pneg %p302
      $region30: #{bert_lm_forward.1} parent=5 // pred_check_branch
        %305 = sbr.rel (%p303) target = $region32
      $region31: #{bert_lm_forward.1} parent=5 // pred_region
        // Predicated region
        $region33: #{bert_lm_forward.1} parent=31 // pred_check
          %p306 = pneg %p81
        $region34: #{bert_lm_forward.1} parent=31 // pred_check_branch
          %308 = sbr.rel (%p306) target = $region36
        $region35: #{bert_lm_forward.1} parent=31 // pred_region
          %p309 = scmp.lt.s32.totalorder %s19, 1
          %s310 = scalar_select %p309, %s19, 1
          %s311 = smul.addr %s310, 4
          %s312 = smul.addr %s311, 4
          %s313 = scalar_lea.vmem %s2, %s312
        $region36: #{bert_lm_forward.1} parent=31 // pred_fallthru
          _
        // Predicated region
        $region37: #{bert_lm_forward.1} parent=31 // pred_check
          %p314 = pneg %p107
        $region38: #{bert_lm_forward.1} parent=31 // pred_check_branch
          %316 = sbr.rel (%p314) target = $region40
        $region39: #{bert_lm_forward.1} parent=31 // pred_region
          %p317 = scmp.lt.s32.totalorder %s19, 1
          %s318 = scalar_select %p317, %s19, 1
          %s319 = smul.addr %s318, 4
          %s320 = smul.addr %s319, 4
          %s321 = scalar_lea.vmem %s3, %s320
        $region40: #{bert_lm_forward.1} parent=31 // pred_fallthru
          _
        // Predicated region
        $region41: #{bert_lm_forward.1} parent=31 // pred_check
          %p322 = pneg %p133
        $region42: #{bert_lm_forward.1} parent=31 // pred_check_branch
          %324 = sbr.rel (%p322) target = $region44
        $region43: #{bert_lm_forward.1} parent=31 // pred_region
          %p325 = scmp.lt.s32.totalorder %s19, 1
          %s326 = scalar_select %p325, %s19, 1
          %s327 = smul.addr %s326, 4
          %s328 = smul.addr %s327, 4
          %s329 = scalar_lea.vmem %s4, %s328
        $region44: #{bert_lm_forward.1} parent=31 // pred_fallthru
          _
        // Predicated region
        $region45: #{bert_lm_forward.1} parent=31 // pred_check
          %p330 = pneg %p159
        $region46: #{bert_lm_forward.1} parent=31 // pred_check_branch
          %332 = sbr.rel (%p330) target = $region48
        $region47: #{bert_lm_forward.1} parent=31 // pred_region
          %p333 = scmp.lt.s32.totalorder %s19, 1
          %s334 = scalar_select %p333, %s19, 1
          %s335 = smul.addr %s334, 16
          %s336 = smul.addr %s335, 4
          %s337 = scalar_lea.vmem %s5, %s336
        $region48: #{bert_lm_forward.1} parent=31 // pred_fallthru
          _
        // Predicated region
        $region49: #{bert_lm_forward.1} parent=31 // pred_check
          %p338 = pneg %p185
        $region50: #{bert_lm_forward.1} parent=31 // pred_check_branch
          %340 = sbr.rel (%p338) target = $region52
        $region51: #{bert_lm_forward.1} parent=31 // pred_region
          %p341 = scmp.lt.s32.totalorder %s19, 1
          %s342 = scalar_select %p341, %s19, 1
          %s343 = smul.addr %s342, 4
          %s344 = scalar_lea.vmem %s6, %s343
        $region52: #{bert_lm_forward.1} parent=31 // pred_fallthru
          _
      $region32: #{bert_lm_forward.1} parent=5 // pred_fallthru
        _
      %p345 = scmp.le.s32.totalorder 1, %s19
      %p346 = scmp.lt.s32.totalorder %s19, 3
      %p347 = pnand %p345, %p346
      %p348 = pneg %p347
      // Predicated region
      $region53: #{bert_lm_forward.1} parent=5 // pred_check
        _
      $region54: #{bert_lm_forward.1} parent=5 // pred_check_branch
        %350 = sbr.rel (%p347) target = $region56
      $region55: #{bert_lm_forward.1} parent=5 // pred_region
        %s351 = ssub.s32 %s19, 1
        %p352 = pneg %p40
        %p353 = pneg %p37
        %p354 = pneg %p61
        %p355 = pneg %p58
        %p356 = scmp.lt.s32.totalorder %s24, 1
        %s357 = scalar_select %p356, %s24, 1
        %s358 = smul.addr %s357, 4
        %s359 = smul.addr %s358, 4
        %s360 = scalar_lea.vmem %s2, %s359
        %p361 = pneg %p87
        %p362 = pneg %p84
        %p363 = scmp.lt.s32.totalorder %s24, 1
        %s364 = scalar_select %p363, %s24, 1
        %s365 = smul.addr %s364, 4
        %s366 = smul.addr %s365, 4
        %s367 = scalar_lea.vmem %s3, %s366
        %p368 = pneg %p113
        %p369 = pneg %p110
        %p370 = scmp.lt.s32.totalorder %s24, 1
        %s371 = scalar_select %p370, %s24, 1
        %s372 = smul.addr %s371, 4
        %s373 = smul.addr %s372, 4
        %s374 = scalar_lea.vmem %s4, %s373
        %p375 = pneg %p139
        %p376 = pneg %p136
        %p377 = scmp.lt.s32.totalorder %s24, 1
        %s378 = scalar_select %p377, %s24, 1
        %s379 = smul.addr %s378, 16
        %s380 = smul.addr %s379, 4
        %s381 = scalar_lea.vmem %s5, %s380
        %p382 = pneg %p165
        %p383 = pneg %p162
        %p384 = scmp.lt.s32.totalorder %s24, 1
        %s385 = scalar_select %p384, %s24, 1
        %s386 = smul.addr %s385, 4
        %s387 = scalar_lea.vmem %s6, %s386
        %p388 = pneg %p191
        %p389 = pneg %p188
        %p390 = pneg %p212
        %p391 = pneg %p209
        %p392 = pneg %p233
        %p393 = pneg %p230
        %p394 = pneg %p254
        %p395 = pneg %p251
        %p396 = pneg %p275
        %p397 = pneg %p272
        %p398 = scmp.lt.s32.totalorder %s24, 1
        %s399 = scalar_select %p398, %s24, 1
        %s400 = smul.addr %s399, 4
        %s401 = smul.addr %s400, 4
        %s402 = scalar_lea.vmem %s2, %s401
        %p403 = scmp.lt.s32.totalorder %s24, 1
        %s404 = scalar_select %p403, %s24, 1
        %s405 = smul.addr %s404, 4
        %s406 = smul.addr %s405, 4
        %s407 = scalar_lea.vmem %s3, %s406
        %p408 = scmp.lt.s32.totalorder %s24, 1
        %s409 = scalar_select %p408, %s24, 1
        %s410 = smul.addr %s409, 4
        %s411 = smul.addr %s410, 4
        %s412 = scalar_lea.vmem %s4, %s411
        %p413 = scmp.lt.s32.totalorder %s24, 1
        %s414 = scalar_select %p413, %s24, 1
        %s415 = smul.addr %s414, 16
        %s416 = smul.addr %s415, 4
        %s417 = scalar_lea.vmem %s5, %s416
        %p418 = scmp.lt.s32.totalorder %s24, 1
        %s419 = scalar_select %p418, %s24, 1
        %s420 = smul.addr %s419, 4
        %s421 = scalar_lea.vmem %s6, %s420
        %p423 = scmp.eq.s32.totalorder %s24, 0
        // Predicated region
        $region57: #{bert_lm_forward.1} parent=55 // pred_check
          %p424 = pneg %p423
        $region58: #{bert_lm_forward.1} parent=55 // pred_check_branch
          %426 = sbr.rel (%p424) target = $region60
        $region59: #{bert_lm_forward.1} parent=55 // pred_region
          %v427 = vld [vmem:[%s1] sm:$0xff]
          %v428 = vld [vmem:[%s1 + $0x8] sm:$0xff]
          %vm429 = vcmask 261120
          %430 = vst.msk [vmem:[#allocation2] sm:$0xff] %vm429, %v427
          %431 = vst.msk [vmem:[#allocation2 + $0x8] sm:$0xff] %vm429, %v428
        $region60: #{bert_lm_forward.1} parent=55 // pred_fallthru
          _
        %v432 = vld [vmem:[#allocation2] sm:$0xff]
        %v433 = vld [vmem:[#allocation2 + $0x8] sm:$0xff]
        %v434 = vpack.c.bf16 %v433, %v432
        %v435 = vld [vmem:[%s421] sm:$0xf]
        %v436 = vld [vmem:[%s402] sm:$0xf]
        %v437 = vld [vmem:[%s402 + $0x4] sm:$0xf]
        %v438 = vld [vmem:[%s402 + $0x8] sm:$0xf]
        %v439 = vld [vmem:[%s402 + $0xc] sm:$0xf]
        %v440 = vlaneseq
        %v441 = vshrl.u32 %v440, 7
        %v442 = vsub.s32 0, %v441
        %v443 = vrot.slane %v435, %v442
        %v448 = vunpack.c.l.b16 %v436
        %v449 = vunpack.c.l.b16 %v437
        %v450 = vunpack.c.l.b16 %v438
        %v451 = vunpack.c.l.b16 %v439
        %v452 = vpack.c.b16 %v449, %v448
        %v453 = vpack.c.b16 %v451, %v450
        %vm456 = vcmask 261120
        %v458 = vsel %vm456, %v434, 0
        %460 = vmatprep.subr.bf16.mxu0 0
        %461 = vmatpush1.bf16.msra.mxu0 0
        %462 = vmatprep.subr.bf16.mxu0 0
        %463 = vmatpush1.bf16.msra.mxu0 0
        %464 = vmatprep.subr.bf16.mxu0 0
        %465 = vmatpush1.bf16.msra.mxu0 0
        %466 = vmatprep.subr.bf16.mxu0 0
        %467 = vmatpush1.bf16.msra.mxu0 0
        %468 = vmatprep.subr.bf16.mxu0 0
        %469 = vmatpush1.bf16.msra.mxu0 0
        %470 = vmatprep.subr.bf16.mxu0 0
        %471 = vmatpush1.bf16.msra.mxu0 0
        %472 = vmatprep.subr.bf16.mxu0 0
        %473 = vmatpush1.bf16.msra.mxu0 %v453
        %474 = vmatprep.subr.bf16.mxu0 0
        %475 = vmatpush1.bf16.msra.mxu0 %v452
        %476 = vmatprep.subr.bf16.mxu0 0
        %477 = vmatpush2.bf16.msra.mxu0 0
        %478 = vmatprep.subr.bf16.mxu0 0
        %479 = vmatpush2.bf16.msra.mxu0 0
        %480 = vmatprep.subr.bf16.mxu0 0
        %481 = vmatpush2.bf16.msra.mxu0 0
        %482 = vmatprep.subr.bf16.mxu0 0
        %483 = vmatpush2.bf16.msra.mxu0 0
        %484 = vmatprep.subr.bf16.mxu0 0
        %485 = vmatpush2.bf16.msra.mxu0 0
        %486 = vmatprep.subr.bf16.mxu0 0
        %487 = vmatpush2.bf16.msra.mxu0 0
        %488 = vmatprep.subr.bf16.mxu0 0
        %489 = vmatpush2.bf16.msra.mxu0 0
        %490 = vmatprep.subr.bf16.mxu0 0
        %491 = vmatpush2.bf16.msra.mxu0 0
        %492 = vmatprep.mubr.bf16.mxu0 0
        %493 = vmatmul.mubr.bf16.gmra.mxu0 %v458
        %v494 = vpop.f32.mrf.mxu0
        %v495 = vadd.f32 %v443, %v494
        %v496 = vpop.f32.mrf.mxu0
        %v497 = vpop.f32.mrf.mxu0
        %v498 = vadd.f32 %v443, %v497
        %v499 = vpop.f32.mrf.mxu0
        %500 = vdwg.mxu0
        %v501 = vld [vmem:[%s0] sm:$0x3]
        %v504 = vunpack.c.l.s4 1966171168
        %v505 = vunpack.c.0.s8 %v504
        %v506 = vlaneseq
        %v507 = vshrl.u32 %v506, 7
        %v508 = vsub.s32 %v505, %v507
        %v509 = vrot.slane %v501, %v508
        %v510 = vcombine.high %v509, %v509
        %v512 = vunpack.c.l.s4 1966171168
        %v513 = vunpack.c.0.s8 %v512
        %v514 = vlaneseq
        %v515 = vshrl.u32 %v514, 7
        %v516 = vsub.s32 %v513, %v515
        %v517 = vrot.slane %v509, %v516
        %v519 = vunpack.c.l.s4 1966171168
        %v520 = vunpack.c.0.s8 %v519
        %v521 = vlaneseq
        %v522 = vshrl.u32 %v521, 7
        %v523 = vsub.s32 %v520, %v522
        %v524 = vrot.slane %v510, %v523
        %vm527 = vcmp.gt.f32.partialorder %v517, 0.0
        %vm528 = vcmp.gt.f32.partialorder %v524, 0.0
        %v529 = vld [vmem:[%s407] sm:$0xf]
        %v530 = vld [vmem:[%s407 + $0x4] sm:$0xf]
        %v531 = vld [vmem:[%s407 + $0x8] sm:$0xf]
        %v532 = vld [vmem:[%s407 + $0xc] sm:$0xf]
        %v533 = vpack.c.bf16 %v495, %v495
        %v534 = vpack.c.bf16 %v498, %v498
        %536 = vrot.lane.b32.xlu0 %v533, 96
        %v537 = vpop.permute.xlu0 %536
        %vm538 = vcmask 64512
        %v540 = vsel %vm538, %v533, 0
        %v543 = vsel %vm538, %v537, 0
        %545 = vmatprep.subr.bf16.mxu0 0
        %546 = vmatpush1.bf16.xpose.msra.mxu0 0
        %547 = vmatprep.subr.bf16.mxu0 0
        %548 = vmatpush1.bf16.xpose.msra.mxu0 0
        %549 = vmatprep.subr.bf16.mxu0 0
        %550 = vmatpush1.bf16.xpose.msra.mxu0 0
        %551 = vmatprep.subr.bf16.mxu0 0
        %552 = vmatpush1.bf16.xpose.msra.mxu0 0
        %553 = vmatprep.subr.bf16.mxu0 0
        %554 = vmatpush1.bf16.xpose.msra.mxu0 0
        %555 = vmatprep.subr.bf16.mxu0 0
        %556 = vmatpush1.bf16.xpose.msra.mxu0 0
        %557 = vmatprep.subr.bf16.mxu0 0
        %558 = vmatpush1.bf16.xpose.msra.mxu0 0
        %559 = vmatprep.subr.bf16.mxu0 0
        %560 = vmatpush1.bf16.xpose.msra.mxu0 %v543
        %561 = vmatprep.subr.bf16.mxu0 0
        %562 = vmatpush2.bf16.xpose.msra.mxu0 0
        %563 = vmatprep.subr.bf16.mxu0 0
        %564 = vmatpush2.bf16.xpose.msra.mxu0 0
        %565 = vmatprep.subr.bf16.mxu0 0
        %566 = vmatpush2.bf16.xpose.msra.mxu0 0
        %567 = vmatprep.subr.bf16.mxu0 0
        %568 = vmatpush2.bf16.xpose.msra.mxu0 0
        %569 = vmatprep.subr.bf16.mxu0 0
        %570 = vmatpush2.bf16.xpose.msra.mxu0 0
        %571 = vmatprep.subr.bf16.mxu0 0
        %572 = vmatpush2.bf16.xpose.msra.mxu0 0
        %573 = vmatprep.subr.bf16.mxu0 0
        %574 = vmatpush2.bf16.xpose.msra.mxu0 0
        %575 = vmatprep.subr.bf16.mxu0 0
        %576 = vmatpush2.bf16.xpose.msra.mxu0 0
        %577 = vmatprep.mubr.bf16.mxu0 0
        %578 = vmatmul.mubr.bf16.gmra.mxu0 %v540
        %v579 = vpop.f32.mrf.mxu0
        %v580 = vadd.f32 0.0, %v579
        %v581 = vpop.f32.mrf.mxu0
        %v582 = vpop.f32.mrf.mxu0
        %v583 = vpop.f32.mrf.mxu0
        %584 = vdwg.mxu0
        %586 = vrot.lane.b32.xlu0 %v534, 96
        %v587 = vpop.permute.xlu0 %586
        %v589 = vsel %vm538, %v534, 0
        %v592 = vsel %vm538, %v587, 0
        %594 = vmatprep.subr.bf16.mxu0 0
        %595 = vmatpush1.bf16.xpose.msra.mxu0 0
        %596 = vmatprep.subr.bf16.mxu0 0
        %597 = vmatpush1.bf16.xpose.msra.mxu0 0
        %598 = vmatprep.subr.bf16.mxu0 0
        %599 = vmatpush1.bf16.xpose.msra.mxu0 0
        %600 = vmatprep.subr.bf16.mxu0 0
        %601 = vmatpush1.bf16.xpose.msra.mxu0 0
        %602 = vmatprep.subr.bf16.mxu0 0
        %603 = vmatpush1.bf16.xpose.msra.mxu0 0
        %604 = vmatprep.subr.bf16.mxu0 0
        %605 = vmatpush1.bf16.xpose.msra.mxu0 0
        %606 = vmatprep.subr.bf16.mxu0 0
        %607 = vmatpush1.bf16.xpose.msra.mxu0 0
        %608 = vmatprep.subr.bf16.mxu0 0
        %609 = vmatpush1.bf16.xpose.msra.mxu0 %v592
        %610 = vmatprep.subr.bf16.mxu0 0
        %611 = vmatpush2.bf16.xpose.msra.mxu0 0
        %612 = vmatprep.subr.bf16.mxu0 0
        %613 = vmatpush2.bf16.xpose.msra.mxu0 0
        %614 = vmatprep.subr.bf16.mxu0 0
        %615 = vmatpush2.bf16.xpose.msra.mxu0 0
        %616 = vmatprep.subr.bf16.mxu0 0
        %617 = vmatpush2.bf16.xpose.msra.mxu0 0
        %618 = vmatprep.subr.bf16.mxu0 0
        %619 = vmatpush2.bf16.xpose.msra.mxu0 0
        %620 = vmatprep.subr.bf16.mxu0 0
        %621 = vmatpush2.bf16.xpose.msra.mxu0 0
        %622 = vmatprep.subr.bf16.mxu0 0
        %623 = vmatpush2.bf16.xpose.msra.mxu0 0
        %624 = vmatprep.subr.bf16.mxu0 0
        %625 = vmatpush2.bf16.xpose.msra.mxu0 0
        %626 = vmatprep.mubr.bf16.mxu0 0
        %627 = vmatmul.mubr.bf16.gmra.mxu0 %v589
        %v628 = vpop.f32.mrf.mxu0
        %v629 = vadd.f32 0.0, %v628
        %v630 = vpop.f32.mrf.mxu0
        %v631 = vpop.f32.mrf.mxu0
        %v632 = vpop.f32.mrf.mxu0
        %633 = vdwg.mxu0
        %v634 = vmul.f32 %v580, 0.35355338
        %v635 = vmul.f32 %v629, 0.35355338
        %v636 = vsel %vm527, 1, 0
        %v637 = vsel %vm528, 1, 0
        %v638 = vlaneseq
        %v639 = vshrl.u32 %v638, 7
        %v640 = vsub.s32 0, %v639
        %v641 = vrot.slane %v636, %v640
        %v642 = vlaneseq
        %v643 = vshrl.u32 %v642, 7
        %v644 = vsub.s32 0, %v643
        %v645 = vrot.slane %v637, %v644
        %vm646 = vcmp.eq.s32.totalorder %v641, 1
        %vm647 = vcmp.eq.s32.totalorder %v645, 1
        %v648 = vsel %vm646, %v634, -1e+09
        %v649 = vsel %vm647, %v635, -1e+09
        %v650 = vsel %vm538, %v648, -inf
        %651 = vmax.xlane.f32.xlu0 %v650
        %v652 = vpop.xlane.xlu0 %651
        %v653 = vsel %vm538, %v649, -inf
        %654 = vmax.xlane.f32.xlu0 %v653
        %v655 = vpop.xlane.xlu0 %654
        %v656 = vsub.f32 %v648, %v652
        %v657 = vsub.f32 %v649, %v655
        %v658 = vmul.f32 %v656, 1.442695
        %v659 = vpow.pop %v658
        %v660 = vmul.f32 %v657, 1.442695
        %v661 = vpow.pop %v660
        %v662 = vsel %vm538, %v659, 0.0
        %663 = vadd.xlane.f32.xlu0 %v662
        %v664 = vpop.xlane.xlu0 %663
        %v665 = vsel %vm538, %v661, 0.0
        %666 = vadd.xlane.f32.xlu0 %v665
        %v667 = vpop.xlane.xlu0 %666
        %v668 = vrcp.pop %v664
        %v669 = vrcp.pop %v667
        %v670 = vmul.f32 %v659, %v668
        %v671 = vmul.f32 %v661, %v669
        %v672 = vpack.c.bf16 %v670, %v670
        %v673 = vpack.c.bf16 %v671, %v671
        %674 = vrot.lane.b32.xlu0 %v533, 64
        %v675 = vpop.permute.xlu0 %674
        %v677 = vsel %vm538, %v672, 0
        %vm679 = vcmask 1043456
        %v681 = vsel %vm679, %v675, 0
        %683 = vmatprep.subr.bf16.mxu0 0
        %684 = vmatpush1.bf16.msra.mxu0 0
        %685 = vmatprep.subr.bf16.mxu0 0
        %686 = vmatpush1.bf16.msra.mxu0 0
        %687 = vmatprep.subr.bf16.mxu0 0
        %688 = vmatpush1.bf16.msra.mxu0 0
        %689 = vmatprep.subr.bf16.mxu0 0
        %690 = vmatpush1.bf16.msra.mxu0 0
        %691 = vmatprep.subr.bf16.mxu0 0
        %692 = vmatpush1.bf16.msra.mxu0 0
        %693 = vmatprep.subr.bf16.mxu0 0
        %694 = vmatpush1.bf16.msra.mxu0 0
        %695 = vmatprep.subr.bf16.mxu0 0
        %696 = vmatpush1.bf16.msra.mxu0 0
        %697 = vmatprep.subr.bf16.mxu0 0
        %698 = vmatpush1.bf16.msra.mxu0 %v681
        %699 = vmatprep.subr.bf16.mxu0 0
        %700 = vmatpush2.bf16.msra.mxu0 0
        %701 = vmatprep.subr.bf16.mxu0 0
        %702 = vmatpush2.bf16.msra.mxu0 0
        %703 = vmatprep.subr.bf16.mxu0 0
        %704 = vmatpush2.bf16.msra.mxu0 0
        %705 = vmatprep.subr.bf16.mxu0 0
        %706 = vmatpush2.bf16.msra.mxu0 0
        %707 = vmatprep.subr.bf16.mxu0 0
        %708 = vmatpush2.bf16.msra.mxu0 0
        %709 = vmatprep.subr.bf16.mxu0 0
        %710 = vmatpush2.bf16.msra.mxu0 0
        %711 = vmatprep.subr.bf16.mxu0 0
        %712 = vmatpush2.bf16.msra.mxu0 0
        %713 = vmatprep.subr.bf16.mxu0 0
        %714 = vmatpush2.bf16.msra.mxu0 0
        %715 = vmatprep.mubr.bf16.mxu0 0
        %716 = vmatmul.mubr.bf16.gmra.mxu0 %v677
        %v717 = vpop.f32.mrf.mxu0
        %v718 = vadd.f32 0.0, %v717
        %v719 = vpop.f32.mrf.mxu0
        %v720 = vpop.f32.mrf.mxu0
        %v721 = vpop.f32.mrf.mxu0
        %722 = vdwg.mxu0
        %723 = vrot.lane.b32.xlu0 %v534, 64
        %v724 = vpop.permute.xlu0 %723
        %v726 = vsel %vm538, %v673, 0
        %v729 = vsel %vm679, %v724, 0
        %731 = vmatprep.subr.bf16.mxu0 0
        %732 = vmatpush1.bf16.msra.mxu0 0
        %733 = vmatprep.subr.bf16.mxu0 0
        %734 = vmatpush1.bf16.msra.mxu0 0
        %735 = vmatprep.subr.bf16.mxu0 0
        %736 = vmatpush1.bf16.msra.mxu0 0
        %737 = vmatprep.subr.bf16.mxu0 0
        %738 = vmatpush1.bf16.msra.mxu0 0
        %739 = vmatprep.subr.bf16.mxu0 0
        %740 = vmatpush1.bf16.msra.mxu0 0
        %741 = vmatprep.subr.bf16.mxu0 0
        %742 = vmatpush1.bf16.msra.mxu0 0
        %743 = vmatprep.subr.bf16.mxu0 0
        %744 = vmatpush1.bf16.msra.mxu0 0
        %745 = vmatprep.subr.bf16.mxu0 0
        %746 = vmatpush1.bf16.msra.mxu0 %v729
        %747 = vmatprep.subr.bf16.mxu0 0
        %748 = vmatpush2.bf16.msra.mxu0 0
        %749 = vmatprep.subr.bf16.mxu0 0
        %750 = vmatpush2.bf16.msra.mxu0 0
        %751 = vmatprep.subr.bf16.mxu0 0
        %752 = vmatpush2.bf16.msra.mxu0 0
        %753 = vmatprep.subr.bf16.mxu0 0
        %754 = vmatpush2.bf16.msra.mxu0 0
        %755 = vmatprep.subr.bf16.mxu0 0
        %756 = vmatpush2.bf16.msra.mxu0 0
        %757 = vmatprep.subr.bf16.mxu0 0
        %758 = vmatpush2.bf16.msra.mxu0 0
        %759 = vmatprep.subr.bf16.mxu0 0
        %760 = vmatpush2.bf16.msra.mxu0 0
        %761 = vmatprep.subr.bf16.mxu0 0
        %762 = vmatpush2.bf16.msra.mxu0 0
        %763 = vmatprep.mubr.bf16.mxu0 0
        %764 = vmatmul.mubr.bf16.gmra.mxu0 %v726
        %v765 = vpop.f32.mrf.mxu0
        %v766 = vadd.f32 0.0, %v765
        %v767 = vpop.f32.mrf.mxu0
        %v768 = vpop.f32.mrf.mxu0
        %v769 = vpop.f32.mrf.mxu0
        %770 = vdwg.mxu0
        %v771 = vpack.c.bf16 %v766, %v718
        %772 = vrot.lane.b32.xlu0 %v533, 120
        %v773 = vpop.permute.xlu0 %772
        %774 = vrot.lane.b32.xlu0 %v533, 88
        %v775 = vpop.permute.xlu0 %774
        %v777 = vsel %vm538, %v773, 0
        %v780 = vsel %vm538, %v775, 0
        %782 = vmatprep.subr.bf16.mxu0 0
        %783 = vmatpush1.bf16.xpose.msra.mxu0 0
        %784 = vmatprep.subr.bf16.mxu0 0
        %785 = vmatpush1.bf16.xpose.msra.mxu0 0
        %786 = vmatprep.subr.bf16.mxu0 0
        %787 = vmatpush1.bf16.xpose.msra.mxu0 0
        %788 = vmatprep.subr.bf16.mxu0 0
        %789 = vmatpush1.bf16.xpose.msra.mxu0 0
        %790 = vmatprep.subr.bf16.mxu0 0
        %791 = vmatpush1.bf16.xpose.msra.mxu0 0
        %792 = vmatprep.subr.bf16.mxu0 0
        %793 = vmatpush1.bf16.xpose.msra.mxu0 0
        %794 = vmatprep.subr.bf16.mxu0 0
        %795 = vmatpush1.bf16.xpose.msra.mxu0 0
        %796 = vmatprep.subr.bf16.mxu0 0
        %797 = vmatpush1.bf16.xpose.msra.mxu0 %v780
        %798 = vmatprep.subr.bf16.mxu0 0
        %799 = vmatpush2.bf16.xpose.msra.mxu0 0
        %800 = vmatprep.subr.bf16.mxu0 0
        %801 = vmatpush2.bf16.xpose.msra.mxu0 0
        %802 = vmatprep.subr.bf16.mxu0 0
        %803 = vmatpush2.bf16.xpose.msra.mxu0 0
        %804 = vmatprep.subr.bf16.mxu0 0
        %805 = vmatpush2.bf16.xpose.msra.mxu0 0
        %806 = vmatprep.subr.bf16.mxu0 0
        %807 = vmatpush2.bf16.xpose.msra.mxu0 0
        %808 = vmatprep.subr.bf16.mxu0 0
        %809 = vmatpush2.bf16.xpose.msra.mxu0 0
        %810 = vmatprep.subr.bf16.mxu0 0
        %811 = vmatpush2.bf16.xpose.msra.mxu0 0
        %812 = vmatprep.subr.bf16.mxu0 0
        %813 = vmatpush2.bf16.xpose.msra.mxu0 0
        %814 = vmatprep.mubr.bf16.mxu0 0
        %815 = vmatmul.mubr.bf16.gmra.mxu0 %v777
        %v816 = vpop.f32.mrf.mxu0
        %v817 = vadd.f32 0.0, %v816
        %v818 = vpop.f32.mrf.mxu0
        %v819 = vpop.f32.mrf.mxu0
        %v820 = vpop.f32.mrf.mxu0
        %821 = vdwg.mxu0
        %822 = vrot.lane.b32.xlu0 %v534, 120
        %v823 = vpop.permute.xlu0 %822
        %824 = vrot.lane.b32.xlu0 %v534, 88
        %v825 = vpop.permute.xlu0 %824
        %v827 = vsel %vm538, %v823, 0
        %v830 = vsel %vm538, %v825, 0
        %832 = vmatprep.subr.bf16.mxu0 0
        %833 = vmatpush1.bf16.xpose.msra.mxu0 0
        %834 = vmatprep.subr.bf16.mxu0 0
        %835 = vmatpush1.bf16.xpose.msra.mxu0 0
        %836 = vmatprep.subr.bf16.mxu0 0
        %837 = vmatpush1.bf16.xpose.msra.mxu0 0
        %838 = vmatprep.subr.bf16.mxu0 0
        %839 = vmatpush1.bf16.xpose.msra.mxu0 0
        %840 = vmatprep.subr.bf16.mxu0 0
        %841 = vmatpush1.bf16.xpose.msra.mxu0 0
        %842 = vmatprep.subr.bf16.mxu0 0
        %843 = vmatpush1.bf16.xpose.msra.mxu0 0
        %844 = vmatprep.subr.bf16.mxu0 0
        %845 = vmatpush1.bf16.xpose.msra.mxu0 0
        %846 = vmatprep.subr.bf16.mxu0 0
        %847 = vmatpush1.bf16.xpose.msra.mxu0 %v830
        %848 = vmatprep.subr.bf16.mxu0 0
        %849 = vmatpush2.bf16.xpose.msra.mxu0 0
        %850 = vmatprep.subr.bf16.mxu0 0
        %851 = vmatpush2.bf16.xpose.msra.mxu0 0
        %852 = vmatprep.subr.bf16.mxu0 0
        %853 = vmatpush2.bf16.xpose.msra.mxu0 0
        %854 = vmatprep.subr.bf16.mxu0 0
        %855 = vmatpush2.bf16.xpose.msra.mxu0 0
        %856 = vmatprep.subr.bf16.mxu0 0
        %857 = vmatpush2.bf16.xpose.msra.mxu0 0
        %858 = vmatprep.subr.bf16.mxu0 0
        %859 = vmatpush2.bf16.xpose.msra.mxu0 0
        %860 = vmatprep.subr.bf16.mxu0 0
        %861 = vmatpush2.bf16.xpose.msra.mxu0 0
        %862 = vmatprep.subr.bf16.mxu0 0
        %863 = vmatpush2.bf16.xpose.msra.mxu0 0
        %864 = vmatprep.mubr.bf16.mxu0 0
        %865 = vmatmul.mubr.bf16.gmra.mxu0 %v827
        %v866 = vpop.f32.mrf.mxu0
        %v867 = vadd.f32 0.0, %v866
        %v868 = vpop.f32.mrf.mxu0
        %v869 = vpop.f32.mrf.mxu0
        %v870 = vpop.f32.mrf.mxu0
        %871 = vdwg.mxu0
        %v872 = vmul.f32 %v817, 0.35355338
        %v873 = vmul.f32 %v867, 0.35355338
        %v874 = vsel %vm646, %v872, -1e+09
        %v875 = vsel %vm647, %v873, -1e+09
        %v876 = vsel %vm538, %v874, -inf
        %877 = vmax.xlane.f32.xlu0 %v876
        %v878 = vpop.xlane.xlu0 %877
        %v879 = vsel %vm538, %v875, -inf
        %880 = vmax.xlane.f32.xlu0 %v879
        %v881 = vpop.xlane.xlu0 %880
        %v882 = vsub.f32 %v874, %v878
        %v883 = vsub.f32 %v875, %v881
        %v884 = vmul.f32 %v882, 1.442695
        %v885 = vpow.pop %v884
        %v886 = vmul.f32 %v883, 1.442695
        %v887 = vpow.pop %v886
        %v888 = vsel %vm538, %v885, 0.0
        %889 = vadd.xlane.f32.xlu0 %v888
        %v890 = vpop.xlane.xlu0 %889
        %v891 = vsel %vm538, %v887, 0.0
        %892 = vadd.xlane.f32.xlu0 %v891
        %v893 = vpop.xlane.xlu0 %892
        %v894 = vrcp.pop %v890
        %v895 = vrcp.pop %v893
        %v896 = vmul.f32 %v885, %v894
        %v897 = vmul.f32 %v887, %v895
        %v898 = vpack.c.bf16 %v896, %v896
        %v899 = vpack.c.bf16 %v897, %v897
        %900 = vrot.lane.b32.xlu0 %v533, 56
        %v901 = vpop.permute.xlu0 %900
        %v903 = vsel %vm538, %v898, 0
        %v906 = vsel %vm679, %v901, 0
        %908 = vmatprep.subr.bf16.mxu0 0
        %909 = vmatpush1.bf16.msra.mxu0 0
        %910 = vmatprep.subr.bf16.mxu0 0
        %911 = vmatpush1.bf16.msra.mxu0 0
        %912 = vmatprep.subr.bf16.mxu0 0
        %913 = vmatpush1.bf16.msra.mxu0 0
        %914 = vmatprep.subr.bf16.mxu0 0
        %915 = vmatpush1.bf16.msra.mxu0 0
        %916 = vmatprep.subr.bf16.mxu0 0
        %917 = vmatpush1.bf16.msra.mxu0 0
        %918 = vmatprep.subr.bf16.mxu0 0
        %919 = vmatpush1.bf16.msra.mxu0 0
        %920 = vmatprep.subr.bf16.mxu0 0
        %921 = vmatpush1.bf16.msra.mxu0 0
        %922 = vmatprep.subr.bf16.mxu0 0
        %923 = vmatpush1.bf16.msra.mxu0 %v906
        %924 = vmatprep.subr.bf16.mxu0 0
        %925 = vmatpush2.bf16.msra.mxu0 0
        %926 = vmatprep.subr.bf16.mxu0 0
        %927 = vmatpush2.bf16.msra.mxu0 0
        %928 = vmatprep.subr.bf16.mxu0 0
        %929 = vmatpush2.bf16.msra.mxu0 0
        %930 = vmatprep.subr.bf16.mxu0 0
        %931 = vmatpush2.bf16.msra.mxu0 0
        %932 = vmatprep.subr.bf16.mxu0 0
        %933 = vmatpush2.bf16.msra.mxu0 0
        %934 = vmatprep.subr.bf16.mxu0 0
        %935 = vmatpush2.bf16.msra.mxu0 0
        %936 = vmatprep.subr.bf16.mxu0 0
        %937 = vmatpush2.bf16.msra.mxu0 0
        %938 = vmatprep.subr.bf16.mxu0 0
        %939 = vmatpush2.bf16.msra.mxu0 0
        %940 = vmatprep.mubr.bf16.mxu0 0
        %941 = vmatmul.mubr.bf16.gmra.mxu0 %v903
        %v942 = vpop.f32.mrf.mxu0
        %v943 = vadd.f32 0.0, %v942
        %v944 = vpop.f32.mrf.mxu0
        %v945 = vpop.f32.mrf.mxu0
        %v946 = vpop.f32.mrf.mxu0
        %947 = vdwg.mxu0
        %948 = vrot.lane.b32.xlu0 %v534, 56
        %v949 = vpop.permute.xlu0 %948
        %v951 = vsel %vm538, %v899, 0
        %v954 = vsel %vm679, %v949, 0
        %956 = vmatprep.subr.bf16.mxu0 0
        %957 = vmatpush1.bf16.msra.mxu0 0
        %958 = vmatprep.subr.bf16.mxu0 0
        %959 = vmatpush1.bf16.msra.mxu0 0
        %960 = vmatprep.subr.bf16.mxu0 0
        %961 = vmatpush1.bf16.msra.mxu0 0
        %962 = vmatprep.subr.bf16.mxu0 0
        %963 = vmatpush1.bf16.msra.mxu0 0
        %964 = vmatprep.subr.bf16.mxu0 0
        %965 = vmatpush1.bf16.msra.mxu0 0
        %966 = vmatprep.subr.bf16.mxu0 0
        %967 = vmatpush1.bf16.msra.mxu0 0
        %968 = vmatprep.subr.bf16.mxu0 0
        %969 = vmatpush1.bf16.msra.mxu0 0
        %970 = vmatprep.subr.bf16.mxu0 0
        %971 = vmatpush1.bf16.msra.mxu0 %v954
        %972 = vmatprep.subr.bf16.mxu0 0
        %973 = vmatpush2.bf16.msra.mxu0 0
        %974 = vmatprep.subr.bf16.mxu0 0
        %975 = vmatpush2.bf16.msra.mxu0 0
        %976 = vmatprep.subr.bf16.mxu0 0
        %977 = vmatpush2.bf16.msra.mxu0 0
        %978 = vmatprep.subr.bf16.mxu0 0
        %979 = vmatpush2.bf16.msra.mxu0 0
        %980 = vmatprep.subr.bf16.mxu0 0
        %981 = vmatpush2.bf16.msra.mxu0 0
        %982 = vmatprep.subr.bf16.mxu0 0
        %983 = vmatpush2.bf16.msra.mxu0 0
        %984 = vmatprep.subr.bf16.mxu0 0
        %985 = vmatpush2.bf16.msra.mxu0 0
        %986 = vmatprep.subr.bf16.mxu0 0
        %987 = vmatpush2.bf16.msra.mxu0 0
        %988 = vmatprep.mubr.bf16.mxu0 0
        %989 = vmatmul.mubr.bf16.gmra.mxu0 %v951
        %v990 = vpop.f32.mrf.mxu0
        %v991 = vadd.f32 0.0, %v990
        %v992 = vpop.f32.mrf.mxu0
        %v993 = vpop.f32.mrf.mxu0
        %v994 = vpop.f32.mrf.mxu0
        %995 = vdwg.mxu0
        %v996 = vpack.c.bf16 %v991, %v943
        %v998 = vsel %vm538, %v996, 0
        %v1001 = vsel %vm679, %v530, 0
        %1003 = vmatprep.subr.bf16.mxu0 0
        %1004 = vmatpush1.bf16.msra.mxu0 0
        %1005 = vmatprep.subr.bf16.mxu0 0
        %1006 = vmatpush1.bf16.msra.mxu0 0
        %1007 = vmatprep.subr.bf16.mxu0 0
        %1008 = vmatpush1.bf16.msra.mxu0 0
        %1009 = vmatprep.subr.bf16.mxu0 0
        %1010 = vmatpush1.bf16.msra.mxu0 0
        %1011 = vmatprep.subr.bf16.mxu0 0
        %1012 = vmatpush1.bf16.msra.mxu0 0
        %1013 = vmatprep.subr.bf16.mxu0 0
        %1014 = vmatpush1.bf16.msra.mxu0 0
        %1015 = vmatprep.subr.bf16.mxu0 0
        %1016 = vmatpush1.bf16.msra.mxu0 0
        %1017 = vmatprep.subr.bf16.mxu0 0
        %1018 = vmatpush1.bf16.msra.mxu0 %v1001
        %1019 = vmatprep.subr.bf16.mxu0 0
        %1020 = vmatpush2.bf16.msra.mxu0 0
        %1021 = vmatprep.subr.bf16.mxu0 0
        %1022 = vmatpush2.bf16.msra.mxu0 0
        %1023 = vmatprep.subr.bf16.mxu0 0
        %1024 = vmatpush2.bf16.msra.mxu0 0
        %1025 = vmatprep.subr.bf16.mxu0 0
        %1026 = vmatpush2.bf16.msra.mxu0 0
        %1027 = vmatprep.subr.bf16.mxu0 0
        %1028 = vmatpush2.bf16.msra.mxu0 0
        %1029 = vmatprep.subr.bf16.mxu0 0
        %1030 = vmatpush2.bf16.msra.mxu0 0
        %1031 = vmatprep.subr.bf16.mxu0 0
        %1032 = vmatpush2.bf16.msra.mxu0 0
        %1033 = vmatprep.subr.bf16.mxu0 0
        %1034 = vmatpush2.bf16.msra.mxu0 0
        %1035 = vmatprep.mubr.bf16.mxu0 0
        %1036 = vmatmul.mubr.bf16.gmra.mxu0 %v998
        %v1037 = vpop.f32.mrf.mxu0
        %v1038 = vadd.f32 0.0, %v1037
        %v1039 = vpop.f32.mrf.mxu0
        %v1040 = vpop.f32.mrf.mxu0
        %v1041 = vadd.f32 0.0, %v1040
        %v1042 = vpop.f32.mrf.mxu0
        %1043 = vdwg.mxu0
        %v1045 = vsel %vm538, %v771, 0
        %v1048 = vsel %vm679, %v529, 0
        %1050 = vmatprep.subr.bf16.mxu0 0
        %1051 = vmatpush1.bf16.msra.mxu0 0
        %1052 = vmatprep.subr.bf16.mxu0 0
        %1053 = vmatpush1.bf16.msra.mxu0 0
        %1054 = vmatprep.subr.bf16.mxu0 0
        %1055 = vmatpush1.bf16.msra.mxu0 0
        %1056 = vmatprep.subr.bf16.mxu0 0
        %1057 = vmatpush1.bf16.msra.mxu0 0
        %1058 = vmatprep.subr.bf16.mxu0 0
        %1059 = vmatpush1.bf16.msra.mxu0 0
        %1060 = vmatprep.subr.bf16.mxu0 0
        %1061 = vmatpush1.bf16.msra.mxu0 0
        %1062 = vmatprep.subr.bf16.mxu0 0
        %1063 = vmatpush1.bf16.msra.mxu0 0
        %1064 = vmatprep.subr.bf16.mxu0 0
        %1065 = vmatpush1.bf16.msra.mxu0 %v1048
        %1066 = vmatprep.subr.bf16.mxu0 0
        %1067 = vmatpush2.bf16.msra.mxu0 0
        %1068 = vmatprep.subr.bf16.mxu0 0
        %1069 = vmatpush2.bf16.msra.mxu0 0
        %1070 = vmatprep.subr.bf16.mxu0 0
        %1071 = vmatpush2.bf16.msra.mxu0 0
        %1072 = vmatprep.subr.bf16.mxu0 0
        %1073 = vmatpush2.bf16.msra.mxu0 0
        %1074 = vmatprep.subr.bf16.mxu0 0
        %1075 = vmatpush2.bf16.msra.mxu0 0
        %1076 = vmatprep.subr.bf16.mxu0 0
        %1077 = vmatpush2.bf16.msra.mxu0 0
        %1078 = vmatprep.subr.bf16.mxu0 0
        %1079 = vmatpush2.bf16.msra.mxu0 0
        %1080 = vmatprep.subr.bf16.mxu0 0
        %1081 = vmatpush2.bf16.msra.mxu0 0
        %1082 = vmatprep.mubr.bf16.mxu0 0
        %1083 = vmatmul.mubr.bf16.gmra.mxu0 %v1045
        %v1084 = vpop.f32.mrf.mxu0
        %v1085 = vadd.f32 %v1038, %v1084
        %v1086 = vpop.f32.mrf.mxu0
        %v1087 = vpop.f32.mrf.mxu0
        %v1088 = vadd.f32 %v1041, %v1087
        %v1089 = vpop.f32.mrf.mxu0
        %1090 = vdwg.mxu0
        %1091 = vrot.lane.b32.xlu0 %v533, 112
        %v1092 = vpop.permute.xlu0 %1091
        %1093 = vrot.lane.b32.xlu0 %v533, 80
        %v1094 = vpop.permute.xlu0 %1093
        %v1096 = vsel %vm538, %v1092, 0
        %v1099 = vsel %vm538, %v1094, 0
        %1101 = vmatprep.subr.bf16.mxu0 0
        %1102 = vmatpush1.bf16.xpose.msra.mxu0 0
        %1103 = vmatprep.subr.bf16.mxu0 0
        %1104 = vmatpush1.bf16.xpose.msra.mxu0 0
        %1105 = vmatprep.subr.bf16.mxu0 0
        %1106 = vmatpush1.bf16.xpose.msra.mxu0 0
        %1107 = vmatprep.subr.bf16.mxu0 0
        %1108 = vmatpush1.bf16.xpose.msra.mxu0 0
        %1109 = vmatprep.subr.bf16.mxu0 0
        %1110 = vmatpush1.bf16.xpose.msra.mxu0 0
        %1111 = vmatprep.subr.bf16.mxu0 0
        %1112 = vmatpush1.bf16.xpose.msra.mxu0 0
        %1113 = vmatprep.subr.bf16.mxu0 0
        %1114 = vmatpush1.bf16.xpose.msra.mxu0 0
        %1115 = vmatprep.subr.bf16.mxu0 0
        %1116 = vmatpush1.bf16.xpose.msra.mxu0 %v1099
        %1117 = vmatprep.subr.bf16.mxu0 0
        %1118 = vmatpush2.bf16.xpose.msra.mxu0 0
        %1119 = vmatprep.subr.bf16.mxu0 0
        %1120 = vmatpush2.bf16.xpose.msra.mxu0 0
        %1121 = vmatprep.subr.bf16.mxu0 0
        %1122 = vmatpush2.bf16.xpose.msra.mxu0 0
        %1123 = vmatprep.subr.bf16.mxu0 0
        %1124 = vmatpush2.bf16.xpose.msra.mxu0 0
        %1125 = vmatprep.subr.bf16.mxu0 0
        %1126 = vmatpush2.bf16.xpose.msra.mxu0 0
        %1127 = vmatprep.subr.bf16.mxu0 0
        %1128 = vmatpush2.bf16.xpose.msra.mxu0 0
        %1129 = vmatprep.subr.bf16.mxu0 0
        %1130 = vmatpush2.bf16.xpose.msra.mxu0 0
        %1131 = vmatprep.subr.bf16.mxu0 0
        %1132 = vmatpush2.bf16.xpose.msra.mxu0 0
        %1133 = vmatprep.mubr.bf16.mxu0 0
        %1134 = vmatmul.mubr.bf16.gmra.mxu0 %v1096
        %v1135 = vpop.f32.mrf.mxu0
        %v1136 = vadd.f32 0.0, %v1135
        %v1137 = vpop.f32.mrf.mxu0
        %v1138 = vpop.f32.mrf.mxu0
        %v1139 = vpop.f32.mrf.mxu0
        %1140 = vdwg.mxu0
        %1141 = vrot.lane.b32.xlu0 %v534, 112
        %v1142 = vpop.permute.xlu0 %1141
        %1143 = vrot.lane.b32.xlu0 %v534, 80
        %v1144 = vpop.permute.xlu0 %1143
        %v1146 = vsel %vm538, %v1142, 0
        %v1149 = vsel %vm538, %v1144, 0
        %1151 = vmatprep.subr.bf16.mxu0 0
        %1152 = vmatpush1.bf16.xpose.msra.mxu0 0
        %1153 = vmatprep.subr.bf16.mxu0 0
        %1154 = vmatpush1.bf16.xpose.msra.mxu0 0
        %1155 = vmatprep.subr.bf16.mxu0 0
        %1156 = vmatpush1.bf16.xpose.msra.mxu0 0
        %1157 = vmatprep.subr.bf16.mxu0 0
        %1158 = vmatpush1.bf16.xpose.msra.mxu0 0
        %1159 = vmatprep.subr.bf16.mxu0 0
        %1160 = vmatpush1.bf16.xpose.msra.mxu0 0
        %1161 = vmatprep.subr.bf16.mxu0 0
        %1162 = vmatpush1.bf16.xpose.msra.mxu0 0
        %1163 = vmatprep.subr.bf16.mxu0 0
        %1164 = vmatpush1.bf16.xpose.msra.mxu0 0
        %1165 = vmatprep.subr.bf16.mxu0 0
        %1166 = vmatpush1.bf16.xpose.msra.mxu0 %v1149
        %1167 = vmatprep.subr.bf16.mxu0 0
        %1168 = vmatpush2.bf16.xpose.msra.mxu0 0
        %1169 = vmatprep.subr.bf16.mxu0 0
        %1170 = vmatpush2.bf16.xpose.msra.mxu0 0
        %1171 = vmatprep.subr.bf16.mxu0 0
        %1172 = vmatpush2.bf16.xpose.msra.mxu0 0
        %1173 = vmatprep.subr.bf16.mxu0 0
        %1174 = vmatpush2.bf16.xpose.msra.mxu0 0
        %1175 = vmatprep.subr.bf16.mxu0 0
        %1176 = vmatpush2.bf16.xpose.msra.mxu0 0
        %1177 = vmatprep.subr.bf16.mxu0 0
        %1178 = vmatpush2.bf16.xpose.msra.mxu0 0
        %1179 = vmatprep.subr.bf16.mxu0 0
        %1180 = vmatpush2.bf16.xpose.msra.mxu0 0
        %1181 = vmatprep.subr.bf16.mxu0 0
        %1182 = vmatpush2.bf16.xpose.msra.mxu0 0
        %1183 = vmatprep.mubr.bf16.mxu0 0
        %1184 = vmatmul.mubr.bf16.gmra.mxu0 %v1146
        %v1185 = vpop.f32.mrf.mxu0
        %v1186 = vadd.f32 0.0, %v1185
        %v1187 = vpop.f32.mrf.mxu0
        %v1188 = vpop.f32.mrf.mxu0
        %v1189 = vpop.f32.mrf.mxu0
        %1190 = vdwg.mxu0
        %v1191 = vmul.f32 %v1136, 0.35355338
        %v1192 = vmul.f32 %v1186, 0.35355338
        %v1193 = vsel %vm646, %v1191, -1e+09
        %v1194 = vsel %vm647, %v1192, -1e+09
        %v1195 = vsel %vm538, %v1193, -inf
        %1196 = vmax.xlane.f32.xlu0 %v1195
        %v1197 = vpop.xlane.xlu0 %1196
        %v1198 = vsel %vm538, %v1194, -inf
        %1199 = vmax.xlane.f32.xlu0 %v1198
        %v1200 = vpop.xlane.xlu0 %1199
        %v1201 = vsub.f32 %v1193, %v1197
        %v1202 = vsub.f32 %v1194, %v1200
        %v1203 = vmul.f32 %v1201, 1.442695
        %v1204 = vpow.pop %v1203
        %v1205 = vmul.f32 %v1202, 1.442695
        %v1206 = vpow.pop %v1205
        %v1207 = vsel %vm538, %v1204, 0.0
        %1208 = vadd.xlane.f32.xlu0 %v1207
        %v1209 = vpop.xlane.xlu0 %1208
        %v1210 = vsel %vm538, %v1206, 0.0
        %1211 = vadd.xlane.f32.xlu0 %v1210
        %v1212 = vpop.xlane.xlu0 %1211
        %v1213 = vrcp.pop %v1209
        %v1214 = vrcp.pop %v1212
        %v1215 = vmul.f32 %v1204, %v1213
        %v1216 = vmul.f32 %v1206, %v1214
        %v1217 = vpack.c.bf16 %v1215, %v1215
        %v1218 = vpack.c.bf16 %v1216, %v1216
        %1219 = vrot.lane.b32.xlu0 %v533, 48
        %v1220 = vpop.permute.xlu0 %1219
        %v1222 = vsel %vm538, %v1217, 0
        %v1225 = vsel %vm679, %v1220, 0
        %1227 = vmatprep.subr.bf16.mxu0 0
        %1228 = vmatpush1.bf16.msra.mxu0 0
        %1229 = vmatprep.subr.bf16.mxu0 0
        %1230 = vmatpush1.bf16.msra.mxu0 0
        %1231 = vmatprep.subr.bf16.mxu0 0
        %1232 = vmatpush1.bf16.msra.mxu0 0
        %1233 = vmatprep.subr.bf16.mxu0 0
        %1234 = vmatpush1.bf16.msra.mxu0 0
        %1235 = vmatprep.subr.bf16.mxu0 0
        %1236 = vmatpush1.bf16.msra.mxu0 0
        %1237 = vmatprep.subr.bf16.mxu0 0
        %1238 = vmatpush1.bf16.msra.mxu0 0
        %1239 = vmatprep.subr.bf16.mxu0 0
        %1240 = vmatpush1.bf16.msra.mxu0 0
        %1241 = vmatprep.subr.bf16.mxu0 0
        %1242 = vmatpush1.bf16.msra.mxu0 %v1225
        %1243 = vmatprep.subr.bf16.mxu0 0
        %1244 = vmatpush2.bf16.msra.mxu0 0
        %1245 = vmatprep.subr.bf16.mxu0 0
        %1246 = vmatpush2.bf16.msra.mxu0 0
        %1247 = vmatprep.subr.bf16.mxu0 0
        %1248 = vmatpush2.bf16.msra.mxu0 0
        %1249 = vmatprep.subr.bf16.mxu0 0
        %1250 = vmatpush2.bf16.msra.mxu0 0
        %1251 = vmatprep.subr.bf16.mxu0 0
        %1252 = vmatpush2.bf16.msra.mxu0 0
        %1253 = vmatprep.subr.bf16.mxu0 0
        %1254 = vmatpush2.bf16.msra.mxu0 0
        %1255 = vmatprep.subr.bf16.mxu0 0
        %1256 = vmatpush2.bf16.msra.mxu0 0
        %1257 = vmatprep.subr.bf16.mxu0 0
        %1258 = vmatpush2.bf16.msra.mxu0 0
        %1259 = vmatprep.mubr.bf16.mxu0 0
        %1260 = vmatmul.mubr.bf16.gmra.mxu0 %v1222
        %v1261 = vpop.f32.mrf.mxu0
        %v1262 = vadd.f32 0.0, %v1261
        %v1263 = vpop.f32.mrf.mxu0
        %v1264 = vpop.f32.mrf.mxu0
        %v1265 = vpop.f32.mrf.mxu0
        %1266 = vdwg.mxu0
        %1267 = vrot.lane.b32.xlu0 %v534, 48
        %v1268 = vpop.permute.xlu0 %1267
        %v1270 = vsel %vm538, %v1218, 0
        %v1273 = vsel %vm679, %v1268, 0
        %1275 = vmatprep.subr.bf16.mxu0 0
        %1276 = vmatpush1.bf16.msra.mxu0 0
        %1277 = vmatprep.subr.bf16.mxu0 0
        %1278 = vmatpush1.bf16.msra.mxu0 0
        %1279 = vmatprep.subr.bf16.mxu0 0
        %1280 = vmatpush1.bf16.msra.mxu0 0
        %1281 = vmatprep.subr.bf16.mxu0 0
        %1282 = vmatpush1.bf16.msra.mxu0 0
        %1283 = vmatprep.subr.bf16.mxu0 0
        %1284 = vmatpush1.bf16.msra.mxu0 0
        %1285 = vmatprep.subr.bf16.mxu0 0
        %1286 = vmatpush1.bf16.msra.mxu0 0
        %1287 = vmatprep.subr.bf16.mxu0 0
        %1288 = vmatpush1.bf16.msra.mxu0 0
        %1289 = vmatprep.subr.bf16.mxu0 0
        %1290 = vmatpush1.bf16.msra.mxu0 %v1273
        %1291 = vmatprep.subr.bf16.mxu0 0
        %1292 = vmatpush2.bf16.msra.mxu0 0
        %1293 = vmatprep.subr.bf16.mxu0 0
        %1294 = vmatpush2.bf16.msra.mxu0 0
        %1295 = vmatprep.subr.bf16.mxu0 0
        %1296 = vmatpush2.bf16.msra.mxu0 0
        %1297 = vmatprep.subr.bf16.mxu0 0
        %1298 = vmatpush2.bf16.msra.mxu0 0
        %1299 = vmatprep.subr.bf16.mxu0 0
        %1300 = vmatpush2.bf16.msra.mxu0 0
        %1301 = vmatprep.subr.bf16.mxu0 0
        %1302 = vmatpush2.bf16.msra.mxu0 0
        %1303 = vmatprep.subr.bf16.mxu0 0
        %1304 = vmatpush2.bf16.msra.mxu0 0
        %1305 = vmatprep.subr.bf16.mxu0 0
        %1306 = vmatpush2.bf16.msra.mxu0 0
        %1307 = vmatprep.mubr.bf16.mxu0 0
        %1308 = vmatmul.mubr.bf16.gmra.mxu0 %v1270
        %v1309 = vpop.f32.mrf.mxu0
        %v1310 = vadd.f32 0.0, %v1309
        %v1311 = vpop.f32.mrf.mxu0
        %v1312 = vpop.f32.mrf.mxu0
        %v1313 = vpop.f32.mrf.mxu0
        %1314 = vdwg.mxu0
        %v1315 = vpack.c.bf16 %v1310, %v1262
        %v1317 = vsel %vm538, %v1315, 0
        %v1320 = vsel %vm679, %v531, 0
        %1322 = vmatprep.subr.bf16.mxu0 0
        %1323 = vmatpush1.bf16.msra.mxu0 0
        %1324 = vmatprep.subr.bf16.mxu0 0
        %1325 = vmatpush1.bf16.msra.mxu0 0
        %1326 = vmatprep.subr.bf16.mxu0 0
        %1327 = vmatpush1.bf16.msra.mxu0 0
        %1328 = vmatprep.subr.bf16.mxu0 0
        %1329 = vmatpush1.bf16.msra.mxu0 0
        %1330 = vmatprep.subr.bf16.mxu0 0
        %1331 = vmatpush1.bf16.msra.mxu0 0
        %1332 = vmatprep.subr.bf16.mxu0 0
        %1333 = vmatpush1.bf16.msra.mxu0 0
        %1334 = vmatprep.subr.bf16.mxu0 0
        %1335 = vmatpush1.bf16.msra.mxu0 0
        %1336 = vmatprep.subr.bf16.mxu0 0
        %1337 = vmatpush1.bf16.msra.mxu0 %v1320
        %1338 = vmatprep.subr.bf16.mxu0 0
        %1339 = vmatpush2.bf16.msra.mxu0 0
        %1340 = vmatprep.subr.bf16.mxu0 0
        %1341 = vmatpush2.bf16.msra.mxu0 0
        %1342 = vmatprep.subr.bf16.mxu0 0
        %1343 = vmatpush2.bf16.msra.mxu0 0
        %1344 = vmatprep.subr.bf16.mxu0 0
        %1345 = vmatpush2.bf16.msra.mxu0 0
        %1346 = vmatprep.subr.bf16.mxu0 0
        %1347 = vmatpush2.bf16.msra.mxu0 0
        %1348 = vmatprep.subr.bf16.mxu0 0
        %1349 = vmatpush2.bf16.msra.mxu0 0
        %1350 = vmatprep.subr.bf16.mxu0 0
        %1351 = vmatpush2.bf16.msra.mxu0 0
        %1352 = vmatprep.subr.bf16.mxu0 0
        %1353 = vmatpush2.bf16.msra.mxu0 0
        %1354 = vmatprep.mubr.bf16.mxu0 0
        %1355 = vmatmul.mubr.bf16.gmra.mxu0 %v1317
        %v1356 = vpop.f32.mrf.mxu0
        %v1357 = vadd.f32 0.0, %v1356
        %v1358 = vpop.f32.mrf.mxu0
        %v1359 = vpop.f32.mrf.mxu0
        %v1360 = vadd.f32 0.0, %v1359
        %v1361 = vpop.f32.mrf.mxu0
        %1362 = vdwg.mxu0
        %v1363 = vadd.f32 %v1085, %v1357
        %v1364 = vadd.f32 %v1088, %v1360
        %1365 = vrot.lane.b32.xlu0 %v533, 104
        %v1366 = vpop.permute.xlu0 %1365
        %1367 = vrot.lane.b32.xlu0 %v533, 72
        %v1368 = vpop.permute.xlu0 %1367
        %v1370 = vsel %vm538, %v1366, 0
        %v1373 = vsel %vm538, %v1368, 0
        %1375 = vmatprep.subr.bf16.mxu0 0
        %1376 = vmatpush1.bf16.xpose.msra.mxu0 0
        %1377 = vmatprep.subr.bf16.mxu0 0
        %1378 = vmatpush1.bf16.xpose.msra.mxu0 0
        %1379 = vmatprep.subr.bf16.mxu0 0
        %1380 = vmatpush1.bf16.xpose.msra.mxu0 0
        %1381 = vmatprep.subr.bf16.mxu0 0
        %1382 = vmatpush1.bf16.xpose.msra.mxu0 0
        %1383 = vmatprep.subr.bf16.mxu0 0
        %1384 = vmatpush1.bf16.xpose.msra.mxu0 0
        %1385 = vmatprep.subr.bf16.mxu0 0
        %1386 = vmatpush1.bf16.xpose.msra.mxu0 0
        %1387 = vmatprep.subr.bf16.mxu0 0
        %1388 = vmatpush1.bf16.xpose.msra.mxu0 0
        %1389 = vmatprep.subr.bf16.mxu0 0
        %1390 = vmatpush1.bf16.xpose.msra.mxu0 %v1373
        %1391 = vmatprep.subr.bf16.mxu0 0
        %1392 = vmatpush2.bf16.xpose.msra.mxu0 0
        %1393 = vmatprep.subr.bf16.mxu0 0
        %1394 = vmatpush2.bf16.xpose.msra.mxu0 0
        %1395 = vmatprep.subr.bf16.mxu0 0
        %1396 = vmatpush2.bf16.xpose.msra.mxu0 0
        %1397 = vmatprep.subr.bf16.mxu0 0
        %1398 = vmatpush2.bf16.xpose.msra.mxu0 0
        %1399 = vmatprep.subr.bf16.mxu0 0
        %1400 = vmatpush2.bf16.xpose.msra.mxu0 0
        %1401 = vmatprep.subr.bf16.mxu0 0
        %1402 = vmatpush2.bf16.xpose.msra.mxu0 0
        %1403 = vmatprep.subr.bf16.mxu0 0
        %1404 = vmatpush2.bf16.xpose.msra.mxu0 0
        %1405 = vmatprep.subr.bf16.mxu0 0
        %1406 = vmatpush2.bf16.xpose.msra.mxu0 0
        %1407 = vmatprep.mubr.bf16.mxu0 0
        %1408 = vmatmul.mubr.bf16.gmra.mxu0 %v1370
        %v1409 = vpop.f32.mrf.mxu0
        %v1410 = vadd.f32 0.0, %v1409
        %v1411 = vpop.f32.mrf.mxu0
        %v1412 = vpop.f32.mrf.mxu0
        %v1413 = vpop.f32.mrf.mxu0
        %1414 = vdwg.mxu0
        %1415 = vrot.lane.b32.xlu0 %v534, 104
        %v1416 = vpop.permute.xlu0 %1415
        %1417 = vrot.lane.b32.xlu0 %v534, 72
        %v1418 = vpop.permute.xlu0 %1417
        %v1420 = vsel %vm538, %v1416, 0
        %v1423 = vsel %vm538, %v1418, 0
        %1425 = vmatprep.subr.bf16.mxu0 0
        %1426 = vmatpush1.bf16.xpose.msra.mxu0 0
        %1427 = vmatprep.subr.bf16.mxu0 0
        %1428 = vmatpush1.bf16.xpose.msra.mxu0 0
        %1429 = vmatprep.subr.bf16.mxu0 0
        %1430 = vmatpush1.bf16.xpose.msra.mxu0 0
        %1431 = vmatprep.subr.bf16.mxu0 0
        %1432 = vmatpush1.bf16.xpose.msra.mxu0 0
        %1433 = vmatprep.subr.bf16.mxu0 0
        %1434 = vmatpush1.bf16.xpose.msra.mxu0 0
        %1435 = vmatprep.subr.bf16.mxu0 0
        %1436 = vmatpush1.bf16.xpose.msra.mxu0 0
        %1437 = vmatprep.subr.bf16.mxu0 0
        %1438 = vmatpush1.bf16.xpose.msra.mxu0 0
        %1439 = vmatprep.subr.bf16.mxu0 0
        %1440 = vmatpush1.bf16.xpose.msra.mxu0 %v1423
        %1441 = vmatprep.subr.bf16.mxu0 0
        %1442 = vmatpush2.bf16.xpose.msra.mxu0 0
        %1443 = vmatprep.subr.bf16.mxu0 0
        %1444 = vmatpush2.bf16.xpose.msra.mxu0 0
        %1445 = vmatprep.subr.bf16.mxu0 0
        %1446 = vmatpush2.bf16.xpose.msra.mxu0 0
        %1447 = vmatprep.subr.bf16.mxu0 0
        %1448 = vmatpush2.bf16.xpose.msra.mxu0 0
        %1449 = vmatprep.subr.bf16.mxu0 0
        %1450 = vmatpush2.bf16.xpose.msra.mxu0 0
        %1451 = vmatprep.subr.bf16.mxu0 0
        %1452 = vmatpush2.bf16.xpose.msra.mxu0 0
        %1453 = vmatprep.subr.bf16.mxu0 0
        %1454 = vmatpush2.bf16.xpose.msra.mxu0 0
        %1455 = vmatprep.subr.bf16.mxu0 0
        %1456 = vmatpush2.bf16.xpose.msra.mxu0 0
        %1457 = vmatprep.mubr.bf16.mxu0 0
        %1458 = vmatmul.mubr.bf16.gmra.mxu0 %v1420
        %v1459 = vpop.f32.mrf.mxu0
        %v1460 = vadd.f32 0.0, %v1459
        %v1461 = vpop.f32.mrf.mxu0
        %v1462 = vpop.f32.mrf.mxu0
        %v1463 = vpop.f32.mrf.mxu0
        %1464 = vdwg.mxu0
        %v1465 = vmul.f32 %v1410, 0.35355338
        %v1466 = vmul.f32 %v1460, 0.35355338
        %v1467 = vsel %vm646, %v1465, -1e+09
        %v1468 = vsel %vm647, %v1466, -1e+09
        %v1469 = vsel %vm538, %v1467, -inf
        %1470 = vmax.xlane.f32.xlu0 %v1469
        %v1471 = vpop.xlane.xlu0 %1470
        %v1472 = vsel %vm538, %v1468, -inf
        %1473 = vmax.xlane.f32.xlu0 %v1472
        %v1474 = vpop.xlane.xlu0 %1473
        %v1475 = vsub.f32 %v1467, %v1471
        %v1476 = vsub.f32 %v1468, %v1474
        %v1477 = vmul.f32 %v1475, 1.442695
        %v1478 = vpow.pop %v1477
        %v1479 = vmul.f32 %v1476, 1.442695
        %v1480 = vpow.pop %v1479
        %v1481 = vsel %vm538, %v1478, 0.0
        %1482 = vadd.xlane.f32.xlu0 %v1481
        %v1483 = vpop.xlane.xlu0 %1482
        %v1484 = vsel %vm538, %v1480, 0.0
        %1485 = vadd.xlane.f32.xlu0 %v1484
        %v1486 = vpop.xlane.xlu0 %1485
        %v1487 = vrcp.pop %v1483
        %v1488 = vrcp.pop %v1486
        %v1489 = vmul.f32 %v1478, %v1487
        %v1490 = vmul.f32 %v1480, %v1488
        %v1491 = vpack.c.bf16 %v1489, %v1489
        %v1492 = vpack.c.bf16 %v1490, %v1490
        %1493 = vrot.lane.b32.xlu0 %v533, 40
        %v1494 = vpop.permute.xlu0 %1493
        %v1496 = vsel %vm538, %v1491, 0
        %v1499 = vsel %vm679, %v1494, 0
        %1501 = vmatprep.subr.bf16.mxu0 0
        %1502 = vmatpush1.bf16.msra.mxu0 0
        %1503 = vmatprep.subr.bf16.mxu0 0
        %1504 = vmatpush1.bf16.msra.mxu0 0
        %1505 = vmatprep.subr.bf16.mxu0 0
        %1506 = vmatpush1.bf16.msra.mxu0 0
        %1507 = vmatprep.subr.bf16.mxu0 0
        %1508 = vmatpush1.bf16.msra.mxu0 0
        %1509 = vmatprep.subr.bf16.mxu0 0
        %1510 = vmatpush1.bf16.msra.mxu0 0
        %1511 = vmatprep.subr.bf16.mxu0 0
        %1512 = vmatpush1.bf16.msra.mxu0 0
        %1513 = vmatprep.subr.bf16.mxu0 0
        %1514 = vmatpush1.bf16.msra.mxu0 0
        %1515 = vmatprep.subr.bf16.mxu0 0
        %1516 = vmatpush1.bf16.msra.mxu0 %v1499
        %1517 = vmatprep.subr.bf16.mxu0 0
        %1518 = vmatpush2.bf16.msra.mxu0 0
        %1519 = vmatprep.subr.bf16.mxu0 0
        %1520 = vmatpush2.bf16.msra.mxu0 0
        %1521 = vmatprep.subr.bf16.mxu0 0
        %1522 = vmatpush2.bf16.msra.mxu0 0
        %1523 = vmatprep.subr.bf16.mxu0 0
        %1524 = vmatpush2.bf16.msra.mxu0 0
        %1525 = vmatprep.subr.bf16.mxu0 0
        %1526 = vmatpush2.bf16.msra.mxu0 0
        %1527 = vmatprep.subr.bf16.mxu0 0
        %1528 = vmatpush2.bf16.msra.mxu0 0
        %1529 = vmatprep.subr.bf16.mxu0 0
        %1530 = vmatpush2.bf16.msra.mxu0 0
        %1531 = vmatprep.subr.bf16.mxu0 0
        %1532 = vmatpush2.bf16.msra.mxu0 0
        %1533 = vmatprep.mubr.bf16.mxu0 0
        %1534 = vmatmul.mubr.bf16.gmra.mxu0 %v1496
        %v1535 = vpop.f32.mrf.mxu0
        %v1536 = vadd.f32 0.0, %v1535
        %v1537 = vpop.f32.mrf.mxu0
        %v1538 = vpop.f32.mrf.mxu0
        %v1539 = vpop.f32.mrf.mxu0
        %1540 = vdwg.mxu0
        %1541 = vrot.lane.b32.xlu0 %v534, 40
        %v1542 = vpop.permute.xlu0 %1541
        %v1544 = vsel %vm538, %v1492, 0
        %v1547 = vsel %vm679, %v1542, 0
        %1549 = vmatprep.subr.bf16.mxu0 0
        %1550 = vmatpush1.bf16.msra.mxu0 0
        %1551 = vmatprep.subr.bf16.mxu0 0
        %1552 = vmatpush1.bf16.msra.mxu0 0
        %1553 = vmatprep.subr.bf16.mxu0 0
        %1554 = vmatpush1.bf16.msra.mxu0 0
        %1555 = vmatprep.subr.bf16.mxu0 0
        %1556 = vmatpush1.bf16.msra.mxu0 0
        %1557 = vmatprep.subr.bf16.mxu0 0
        %1558 = vmatpush1.bf16.msra.mxu0 0
        %1559 = vmatprep.subr.bf16.mxu0 0
        %1560 = vmatpush1.bf16.msra.mxu0 0
        %1561 = vmatprep.subr.bf16.mxu0 0
        %1562 = vmatpush1.bf16.msra.mxu0 0
        %1563 = vmatprep.subr.bf16.mxu0 0
        %1564 = vmatpush1.bf16.msra.mxu0 %v1547
        %1565 = vmatprep.subr.bf16.mxu0 0
        %1566 = vmatpush2.bf16.msra.mxu0 0
        %1567 = vmatprep.subr.bf16.mxu0 0
        %1568 = vmatpush2.bf16.msra.mxu0 0
        %1569 = vmatprep.subr.bf16.mxu0 0
        %1570 = vmatpush2.bf16.msra.mxu0 0
        %1571 = vmatprep.subr.bf16.mxu0 0
        %1572 = vmatpush2.bf16.msra.mxu0 0
        %1573 = vmatprep.subr.bf16.mxu0 0
        %1574 = vmatpush2.bf16.msra.mxu0 0
        %1575 = vmatprep.subr.bf16.mxu0 0
        %1576 = vmatpush2.bf16.msra.mxu0 0
        %1577 = vmatprep.subr.bf16.mxu0 0
        %1578 = vmatpush2.bf16.msra.mxu0 0
        %1579 = vmatprep.subr.bf16.mxu0 0
        %1580 = vmatpush2.bf16.msra.mxu0 0
        %1581 = vmatprep.mubr.bf16.mxu0 0
        %1582 = vmatmul.mubr.bf16.gmra.mxu0 %v1544
        %v1583 = vpop.f32.mrf.mxu0
        %v1584 = vadd.f32 0.0, %v1583
        %v1585 = vpop.f32.mrf.mxu0
        %v1586 = vpop.f32.mrf.mxu0
        %v1587 = vpop.f32.mrf.mxu0
        %1588 = vdwg.mxu0
        %v1589 = vpack.c.bf16 %v1584, %v1536
        %v1591 = vsel %vm538, %v1589, 0
        %v1594 = vsel %vm679, %v532, 0
        %1596 = vmatprep.subr.bf16.mxu0 0
        %1597 = vmatpush1.bf16.msra.mxu0 0
        %1598 = vmatprep.subr.bf16.mxu0 0
        %1599 = vmatpush1.bf16.msra.mxu0 0
        %1600 = vmatprep.subr.bf16.mxu0 0
        %1601 = vmatpush1.bf16.msra.mxu0 0
        %1602 = vmatprep.subr.bf16.mxu0 0
        %1603 = vmatpush1.bf16.msra.mxu0 0
        %1604 = vmatprep.subr.bf16.mxu0 0
        %1605 = vmatpush1.bf16.msra.mxu0 0
        %1606 = vmatprep.subr.bf16.mxu0 0
        %1607 = vmatpush1.bf16.msra.mxu0 0
        %1608 = vmatprep.subr.bf16.mxu0 0
        %1609 = vmatpush1.bf16.msra.mxu0 0
        %1610 = vmatprep.subr.bf16.mxu0 0
        %1611 = vmatpush1.bf16.msra.mxu0 %v1594
        %1612 = vmatprep.subr.bf16.mxu0 0
        %1613 = vmatpush2.bf16.msra.mxu0 0
        %1614 = vmatprep.subr.bf16.mxu0 0
        %1615 = vmatpush2.bf16.msra.mxu0 0
        %1616 = vmatprep.subr.bf16.mxu0 0
        %1617 = vmatpush2.bf16.msra.mxu0 0
        %1618 = vmatprep.subr.bf16.mxu0 0
        %1619 = vmatpush2.bf16.msra.mxu0 0
        %1620 = vmatprep.subr.bf16.mxu0 0
        %1621 = vmatpush2.bf16.msra.mxu0 0
        %1622 = vmatprep.subr.bf16.mxu0 0
        %1623 = vmatpush2.bf16.msra.mxu0 0
        %1624 = vmatprep.subr.bf16.mxu0 0
        %1625 = vmatpush2.bf16.msra.mxu0 0
        %1626 = vmatprep.subr.bf16.mxu0 0
        %1627 = vmatpush2.bf16.msra.mxu0 0
        %1628 = vmatprep.mubr.bf16.mxu0 0
        %1629 = vmatmul.mubr.bf16.gmra.mxu0 %v1591
        %v1630 = vpop.f32.mrf.mxu0
        %v1631 = vadd.f32 0.0, %v1630
        %v1632 = vpop.f32.mrf.mxu0
        %v1633 = vpop.f32.mrf.mxu0
        %v1634 = vadd.f32 0.0, %v1633
        %v1635 = vpop.f32.mrf.mxu0
        %1636 = vdwg.mxu0
        %v1637 = vadd.f32 %v1363, %v1631
        %v1638 = vadd.f32 %v1364, %v1634
        %v1639 = vlaneseq
        %v1640 = vshrl.u32 %v1639, 7
        %v1641 = vsub.s32 2, %v1640
        %v1642 = vrot.slane %v435, %v1641
        %v1643 = vadd.f32 %v1637, %v1642
        %v1644 = vadd.f32 %v1638, %v1642
        %v1645 = vadd.f32 %v1643, %v432
        %v1646 = vadd.f32 %v1644, %v433
        %v1647 = vsel %vm456, %v1645, 0.0
        %1648 = vadd.xlane.f32.xlu0 %v1647
        %v1649 = vpop.xlane.xlu0 %1648
        %v1650 = vsel %vm456, %v1646, 0.0
        %1651 = vadd.xlane.f32.xlu0 %v1650
        %v1652 = vpop.xlane.xlu0 %1651
        %v1653 = vrcp.pop 32.0
        %v1654 = vmul.f32 %v1649, %v1653
        %v1655 = vmul.f32 %v1652, %v1653
        %v1656 = vsub.f32 %v1645, %v1654
        %v1657 = vsub.f32 %v1646, %v1655
        %v1658 = vmul.f32 %v1656, %v1656
        %v1659 = vmul.f32 %v1657, %v1657
        %v1660 = vsel %vm456, %v1658, 0.0
        %1661 = vadd.xlane.f32.xlu0 %v1660
        %v1662 = vpop.xlane.xlu0 %1661
        %v1663 = vsel %vm456, %v1659, 0.0
        %1664 = vadd.xlane.f32.xlu0 %v1663
        %v1665 = vpop.xlane.xlu0 %1664
        %v1666 = vmul.f32 %v1662, %v1653
        %v1667 = vmul.f32 %v1665, %v1653
        %v1668 = vadd.f32 %v1666, 1e-05
        %v1669 = vadd.f32 %v1667, 1e-05
        %v1670 = vrsqrt.pop %v1668
        %v1671 = vrsqrt.pop %v1669
        %v1672 = vmul.f32 %v1656, %v1670
        %v1673 = vmul.f32 %v1657, %v1671
        %v1674 = vlaneseq
        %v1675 = vshrl.u32 %v1674, 7
        %v1676 = vsub.s32 3, %v1675
        %v1677 = vrot.slane %v435, %v1676
        %v1678 = vmul.f32 %v1672, %v1677
        %v1679 = vmul.f32 %v1673, %v1677
        %1681 = vrot.lane.b32.xlu0 %v1677, 96
        %v1682 = vpop.permute.xlu0 %1681
        %v1684 = vadd.f32 %v1678, %v1682
        %v1685 = vadd.f32 %v1679, %v1682
        %v1686 = vpack.c.bf16 %v1685, %v1684
        %v1687 = vld [vmem:[%s412] sm:$0xf]
        %v1688 = vld [vmem:[%s412 + $0x4] sm:$0xf]
        %v1689 = vld [vmem:[%s412 + $0x8] sm:$0xf]
        %v1690 = vld [vmem:[%s412 + $0xc] sm:$0xf]
        %v1691 = vlaneseq
        %v1692 = vshrl.u32 %v1691, 7
        %v1693 = vsub.s32 1, %v1692
        %v1694 = vrot.slane %v435, %v1693
        %v1699 = vunpack.c.l.b16 %v1687
        %v1700 = vunpack.c.l.b16 %v1688
        %v1701 = vunpack.c.l.b16 %v1689
        %v1702 = vunpack.c.l.b16 %v1690
        %v1703 = vpack.c.b16 %v1700, %v1699
        %v1704 = vpack.c.b16 %v1702, %v1701
        %v1708 = vsel %vm456, %v1686, 0
        %1710 = vmatprep.subr.bf16.mxu0 0
        %1711 = vmatpush1.bf16.msra.mxu0 0
        %1712 = vmatprep.subr.bf16.mxu0 0
        %1713 = vmatpush1.bf16.msra.mxu0 0
        %1714 = vmatprep.subr.bf16.mxu0 0
        %1715 = vmatpush1.bf16.msra.mxu0 0
        %1716 = vmatprep.subr.bf16.mxu0 0
        %1717 = vmatpush1.bf16.msra.mxu0 0
        %1718 = vmatprep.subr.bf16.mxu0 0
        %1719 = vmatpush1.bf16.msra.mxu0 0
        %1720 = vmatprep.subr.bf16.mxu0 0
        %1721 = vmatpush1.bf16.msra.mxu0 0
        %1722 = vmatprep.subr.bf16.mxu0 0
        %1723 = vmatpush1.bf16.msra.mxu0 %v1704
        %1724 = vmatprep.subr.bf16.mxu0 0
        %1725 = vmatpush1.bf16.msra.mxu0 %v1703
        %1726 = vmatprep.subr.bf16.mxu0 0
        %1727 = vmatpush2.bf16.msra.mxu0 0
        %1728 = vmatprep.subr.bf16.mxu0 0
        %1729 = vmatpush2.bf16.msra.mxu0 0
        %1730 = vmatprep.subr.bf16.mxu0 0
        %1731 = vmatpush2.bf16.msra.mxu0 0
        %1732 = vmatprep.subr.bf16.mxu0 0
        %1733 = vmatpush2.bf16.msra.mxu0 0
        %1734 = vmatprep.subr.bf16.mxu0 0
        %1735 = vmatpush2.bf16.msra.mxu0 0
        %1736 = vmatprep.subr.bf16.mxu0 0
        %1737 = vmatpush2.bf16.msra.mxu0 0
        %1738 = vmatprep.subr.bf16.mxu0 0
        %1739 = vmatpush2.bf16.msra.mxu0 0
        %1740 = vmatprep.subr.bf16.mxu0 0
        %1741 = vmatpush2.bf16.msra.mxu0 0
        %1742 = vmatprep.mubr.bf16.mxu0 0
        %1743 = vmatmul.mubr.bf16.gmra.mxu0 %v1708
        %v1744 = vpop.f32.mrf.mxu0
        %v1745 = vadd.f32 %v1694, %v1744
        %v1746 = vpop.f32.mrf.mxu0
        %v1747 = vpop.f32.mrf.mxu0
        %v1748 = vadd.f32 %v1694, %v1747
        %v1749 = vpop.f32.mrf.mxu0
        %1750 = vdwg.mxu0
        %v1751 = vmul.f32 %v1745, %v1745
        %v1752 = vmul.f32 %v1748, %v1748
        %v1753 = vmul.f32 %v1745, %v1751
        %v1754 = vmul.f32 %v1748, %v1752
        %v1755 = vmul.f32 %v1753, 0.044715
        %v1756 = vmul.f32 %v1754, 0.044715
        %v1757 = vadd.f32 %v1745, %v1755
        %v1758 = vadd.f32 %v1748, %v1756
        %v1759 = vmul.f32 %v1757, 0.7978846
        %v1760 = vmul.f32 %v1758, 0.7978846
        %v1761 = vtanh.pop %v1759
        %v1762 = vtanh.pop %v1760
        %v1763 = vadd.f32 %v1761, 1.0
        %v1764 = vadd.f32 %v1762, 1.0
        %v1765 = vmul.f32 %v1763, 0.5
        %v1766 = vmul.f32 %v1764, 0.5
        %v1767 = vmul.f32 %v1745, %v1765
        %v1768 = vmul.f32 %v1748, %v1766
        %v1769 = vpack.c.bf16 %v1768, %v1767
        %v1770 = vld [vmem:[%s417] sm:$0xf]
        %v1771 = vld [vmem:[%s417 + $0x4] sm:$0xf]
        %v1772 = vld [vmem:[%s417 + $0x8] sm:$0xf]
        %v1773 = vld [vmem:[%s417 + $0xc] sm:$0xf]
        %v1774 = vld [vmem:[%s417 + $0x10] sm:$0xf]
        %v1775 = vld [vmem:[%s417 + $0x14] sm:$0xf]
        %v1776 = vld [vmem:[%s417 + $0x18] sm:$0xf]
        %v1777 = vld [vmem:[%s417 + $0x1c] sm:$0xf]
        %v1778 = vld [vmem:[%s417 + $0x20] sm:$0xf]
        %v1779 = vld [vmem:[%s417 + $0x24] sm:$0xf]
        %v1780 = vld [vmem:[%s417 + $0x28] sm:$0xf]
        %v1781 = vld [vmem:[%s417 + $0x2c] sm:$0xf]
        %v1782 = vld [vmem:[%s417 + $0x30] sm:$0xf]
        %v1783 = vld [vmem:[%s417 + $0x34] sm:$0xf]
        %v1784 = vld [vmem:[%s417 + $0x38] sm:$0xf]
        %v1785 = vld [vmem:[%s417 + $0x3c] sm:$0xf]
        %v1802 = vunpack.c.l.b16 %v1770
        %v1803 = vunpack.c.l.b16 %v1771
        %v1804 = vunpack.c.l.b16 %v1772
        %v1805 = vunpack.c.l.b16 %v1773
        %v1806 = vunpack.c.l.b16 %v1774
        %v1807 = vunpack.c.l.b16 %v1775
        %v1808 = vunpack.c.l.b16 %v1776
        %v1809 = vunpack.c.l.b16 %v1777
        %v1810 = vunpack.c.l.b16 %v1778
        %v1811 = vunpack.c.l.b16 %v1779
        %v1812 = vunpack.c.l.b16 %v1780
        %v1813 = vunpack.c.l.b16 %v1781
        %v1814 = vunpack.c.l.b16 %v1782
        %v1815 = vunpack.c.l.b16 %v1783
        %v1816 = vunpack.c.l.b16 %v1784
        %v1817 = vunpack.c.l.b16 %v1785
        %v1818 = vpack.c.b16 %v1803, %v1802
        %v1819 = vpack.c.b16 %v1805, %v1804
        %v1820 = vpack.c.b16 %v1807, %v1806
        %v1821 = vpack.c.b16 %v1809, %v1808
        %v1822 = vpack.c.b16 %v1811, %v1810
        %v1823 = vpack.c.b16 %v1813, %v1812
        %v1824 = vpack.c.b16 %v1815, %v1814
        %v1825 = vpack.c.b16 %v1817, %v1816
        %1835 = vrot.lane.b32.xlu0 %v1642, 96
        %v1836 = vpop.permute.xlu0 %1835
        %1838 = vmatprep.subr.bf16.mxu0 0
        %1839 = vmatpush1.bf16.msra.mxu0 %v1825
        %1840 = vmatprep.subr.bf16.mxu0 0
        %1841 = vmatpush1.bf16.msra.mxu0 %v1824
        %1842 = vmatprep.subr.bf16.mxu0 0
        %1843 = vmatpush1.bf16.msra.mxu0 %v1823
        %1844 = vmatprep.subr.bf16.mxu0 0
        %1845 = vmatpush1.bf16.msra.mxu0 %v1822
        %1846 = vmatprep.subr.bf16.mxu0 0
        %1847 = vmatpush1.bf16.msra.mxu0 %v1821
        %1848 = vmatprep.subr.bf16.mxu0 0
        %1849 = vmatpush1.bf16.msra.mxu0 %v1820
        %1850 = vmatprep.subr.bf16.mxu0 0
        %1851 = vmatpush1.bf16.msra.mxu0 %v1819
        %1852 = vmatprep.subr.bf16.mxu0 0
        %1853 = vmatpush1.bf16.msra.mxu0 %v1818
        %1854 = vmatprep.subr.bf16.mxu0 0
        %1855 = vmatpush2.bf16.msra.mxu0 0
        %1856 = vmatprep.subr.bf16.mxu0 0
        %1857 = vmatpush2.bf16.msra.mxu0 0
        %1858 = vmatprep.subr.bf16.mxu0 0
        %1859 = vmatpush2.bf16.msra.mxu0 0
        %1860 = vmatprep.subr.bf16.mxu0 0
        %1861 = vmatpush2.bf16.msra.mxu0 0
        %1862 = vmatprep.subr.bf16.mxu0 0
        %1863 = vmatpush2.bf16.msra.mxu0 0
        %1864 = vmatprep.subr.bf16.mxu0 0
        %1865 = vmatpush2.bf16.msra.mxu0 0
        %1866 = vmatprep.subr.bf16.mxu0 0
        %1867 = vmatpush2.bf16.msra.mxu0 0
        %1868 = vmatprep.subr.bf16.mxu0 0
        %1869 = vmatpush2.bf16.msra.mxu0 0
        %1870 = vmatprep.mubr.bf16.mxu0 0
        %1871 = vmatmul.mubr.bf16.gmra.mxu0 %v1769
        %v1872 = vpop.f32.mrf.mxu0
        %v1873 = vadd.f32 %v1836, %v1872
        %v1874 = vpop.f32.mrf.mxu0
        %v1875 = vpop.f32.mrf.mxu0
        %v1876 = vadd.f32 %v1836, %v1875
        %v1877 = vpop.f32.mrf.mxu0
        %1878 = vdwg.mxu0
        %v1879 = vadd.f32 %v1873, %v1684
        %v1880 = vadd.f32 %v1876, %v1685
        %v1881 = vsel %vm456, %v1879, 0.0
        %1882 = vadd.xlane.f32.xlu0 %v1881
        %v1883 = vpop.xlane.xlu0 %1882
        %v1884 = vsel %vm456, %v1880, 0.0
        %1885 = vadd.xlane.f32.xlu0 %v1884
        %v1886 = vpop.xlane.xlu0 %1885
        %v1887 = vmul.f32 %v1883, %v1653
        %v1888 = vmul.f32 %v1886, %v1653
        %v1889 = vsub.f32 %v1879, %v1887
        %v1890 = vsub.f32 %v1880, %v1888
        %v1891 = vmul.f32 %v1889, %v1889
        %v1892 = vmul.f32 %v1890, %v1890
        %v1893 = vsel %vm456, %v1891, 0.0
        %1894 = vadd.xlane.f32.xlu0 %v1893
        %v1895 = vpop.xlane.xlu0 %1894
        %v1896 = vsel %vm456, %v1892, 0.0
        %1897 = vadd.xlane.f32.xlu0 %v1896
        %v1898 = vpop.xlane.xlu0 %1897
        %v1899 = vmul.f32 %v1895, %v1653
        %v1900 = vmul.f32 %v1898, %v1653
        %v1901 = vadd.f32 %v1899, 1e-05
        %v1902 = vadd.f32 %v1900, 1e-05
        %v1903 = vrsqrt.pop %v1901
        %v1904 = vrsqrt.pop %v1902
        %v1905 = vmul.f32 %v1889, %v1903
        %v1906 = vmul.f32 %v1890, %v1904
        %1907 = vrot.lane.b32.xlu0 %v1677, 64
        %v1908 = vpop.permute.xlu0 %1907
        %v1910 = vmul.f32 %v1905, %v1908
        %v1911 = vmul.f32 %v1906, %v1908
        %1912 = vrot.lane.b32.xlu0 %v1677, 32
        %v1913 = vpop.permute.xlu0 %1912
        %v1915 = vadd.f32 %v1910, %v1913
        %v1916 = vadd.f32 %v1911, %v1913
        %1917 = vst.msk [vmem:[#allocation2] sm:$0xff] %vm456, %v1915
        %1918 = vst.msk [vmem:[#allocation2 + $0x8] sm:$0xff] %vm456, %v1916
        %p1919 = scmp.eq.s32.totalorder %s24, 1
        // Predicated region
        $region61: #{bert_lm_forward.1} parent=55 // pred_check
          %p1920 = pneg %p1919
        $region62: #{bert_lm_forward.1} parent=55 // pred_check_branch
          %1922 = sbr.rel (%p1920) target = $region64
        $region63: #{bert_lm_forward.1} parent=55 // pred_region
          %v1923 = vpack.c.bf16 %v1916, %v1915
          %v1924 = vld [vmem:[%s7] sm:$0xf]
          %v1925 = vld [vmem:[%s7 + $0x4] sm:$0xf]
          %v1926 = vld [vmem:[%s7 + $0x8] sm:$0xf]
          %v1927 = vld [vmem:[%s7 + $0xc] sm:$0xf]
          %v1928 = vld [vmem:[%s8] sm:$0x1]
          %v1929 = vlaneseq
          %v1930 = vshrl.u32 %v1929, 7
          %v1931 = vsub.s32 0, %v1930
          %v1932 = vrot.slane %v1928, %v1931
          %v1937 = vunpack.c.l.b16 %v1924
          %v1938 = vunpack.c.l.b16 %v1925
          %v1939 = vunpack.c.l.b16 %v1926
          %v1940 = vunpack.c.l.b16 %v1927
          %v1941 = vpack.c.b16 %v1938, %v1937
          %v1942 = vpack.c.b16 %v1940, %v1939
          %v1946 = vsel %vm456, %v1923, 0
          %1948 = vmatprep.subr.bf16.mxu0 0
          %1949 = vmatpush1.bf16.msra.mxu0 0
          %1950 = vmatprep.subr.bf16.mxu0 0
          %1951 = vmatpush1.bf16.msra.mxu0 0
          %1952 = vmatprep.subr.bf16.mxu0 0
          %1953 = vmatpush1.bf16.msra.mxu0 0
          %1954 = vmatprep.subr.bf16.mxu0 0
          %1955 = vmatpush1.bf16.msra.mxu0 0
          %1956 = vmatprep.subr.bf16.mxu0 0
          %1957 = vmatpush1.bf16.msra.mxu0 0
          %1958 = vmatprep.subr.bf16.mxu0 0
          %1959 = vmatpush1.bf16.msra.mxu0 0
          %1960 = vmatprep.subr.bf16.mxu0 0
          %1961 = vmatpush1.bf16.msra.mxu0 %v1942
          %1962 = vmatprep.subr.bf16.mxu0 0
          %1963 = vmatpush1.bf16.msra.mxu0 %v1941
          %1964 = vmatprep.subr.bf16.mxu0 0
          %1965 = vmatpush2.bf16.msra.mxu0 0
          %1966 = vmatprep.subr.bf16.mxu0 0
          %1967 = vmatpush2.bf16.msra.mxu0 0
          %1968 = vmatprep.subr.bf16.mxu0 0
          %1969 = vmatpush2.bf16.msra.mxu0 0
          %1970 = vmatprep.subr.bf16.mxu0 0
          %1971 = vmatpush2.bf16.msra.mxu0 0
          %1972 = vmatprep.subr.bf16.mxu0 0
          %1973 = vmatpush2.bf16.msra.mxu0 0
          %1974 = vmatprep.subr.bf16.mxu0 0
          %1975 = vmatpush2.bf16.msra.mxu0 0
          %1976 = vmatprep.subr.bf16.mxu0 0
          %1977 = vmatpush2.bf16.msra.mxu0 0
          %1978 = vmatprep.subr.bf16.mxu0 0
          %1979 = vmatpush2.bf16.msra.mxu0 0
          %1980 = vmatprep.mubr.bf16.mxu0 0
          %1981 = vmatmul.mubr.bf16.gmra.mxu0 %v1946
          %v1982 = vpop.f32.mrf.mxu0
          %v1983 = vadd.f32 %v1932, %v1982
          %v1984 = vpop.f32.mrf.mxu0
          %v1985 = vpop.f32.mrf.mxu0
          %v1986 = vadd.f32 %v1932, %v1985
          %v1987 = vpop.f32.mrf.mxu0
          %1988 = vdwg.mxu0
          %1989 = vmax.xlane.f32.xlu0 %v1983
          %v1990 = vpop.xlane.xlu0 %1989
          %1991 = vmax.xlane.f32.xlu0 %v1986
          %v1992 = vpop.xlane.xlu0 %1991
          %v1993 = vsub.f32 %v1983, %v1990
          %v1994 = vsub.f32 %v1986, %v1992
          %v1995 = vmul.f32 %v1993, 1.442695
          %v1996 = vpow.pop %v1995
          %v1997 = vmul.f32 %v1994, 1.442695
          %v1998 = vpow.pop %v1997
          %1999 = vadd.xlane.f32.xlu0 %v1996
          %v2000 = vpop.xlane.xlu0 %1999
          %2001 = vadd.xlane.f32.xlu0 %v1998
          %v2002 = vpop.xlane.xlu0 %2001
          %v2003 = vlog2.pop %v2000
          %v2004 = vmul.f32 %v2003, 0.6931472
          %v2005 = vlog2.pop %v2002
          %v2006 = vmul.f32 %v2005, 0.6931472
          %v2007 = vsub.f32 %v1993, %v2004
          %v2008 = vsub.f32 %v1994, %v2006
          %2009 = vst [vmem:[#allocation5] sm:$0xff] %v2007
          %2010 = vst [vmem:[#allocation5 + $0x8] sm:$0xff] %v2008
          %v2011 = vpack.c.bf16 %v1915, %v1915
          %v2012 = vpack.c.bf16 %v1916, %v1916
          %s2013 = scalar_lea.vmem %s7, 16
          %v2014 = vld [vmem:[%s2013] sm:$0xf]
          %v2015 = vld [vmem:[%s2013 + $0x4] sm:$0xf]
          %v2016 = vld [vmem:[%s2013 + $0x8] sm:$0xf]
          %v2017 = vld [vmem:[%s2013 + $0xc] sm:$0xf]
          %v2018 = vld [vmem:[%s8 + $0x1] sm:$0x1]
          %v2019 = vlaneseq
          %v2020 = vshrl.u32 %v2019, 7
          %v2021 = vsub.s32 0, %v2020
          %v2022 = vrot.slane %v2018, %v2021
          %v2025 = vunpack.c.l.b16 %v2011
          %v2026 = vunpack.c.l.b16 %v2012
          %v2027 = vrot.slane %v2026, 7
          %vm2028 = vcmask 1041409
          %v2029 = vsel %vm2028, %v2027, %v2025
          %v2030 = vpack.c.b16 %v2029, %v2029
          %v2035 = vunpack.c.l.b16 %v2014
          %v2036 = vunpack.c.l.b16 %v2015
          %v2037 = vunpack.c.l.b16 %v2016
          %v2038 = vunpack.c.l.b16 %v2017
          %v2039 = vpack.c.b16 %v2036, %v2035
          %v2040 = vpack.c.b16 %v2038, %v2037
          %v2044 = vsel %vm456, %v2030, 0
          %2046 = vmatprep.subr.bf16.mxu0 0
          %2047 = vmatpush1.bf16.msra.mxu0 0
          %2048 = vmatprep.subr.bf16.mxu0 0
          %2049 = vmatpush1.bf16.msra.mxu0 0
          %2050 = vmatprep.subr.bf16.mxu0 0
          %2051 = vmatpush1.bf16.msra.mxu0 0
          %2052 = vmatprep.subr.bf16.mxu0 0
          %2053 = vmatpush1.bf16.msra.mxu0 0
          %2054 = vmatprep.subr.bf16.mxu0 0
          %2055 = vmatpush1.bf16.msra.mxu0 0
          %2056 = vmatprep.subr.bf16.mxu0 0
          %2057 = vmatpush1.bf16.msra.mxu0 0
          %2058 = vmatprep.subr.bf16.mxu0 0
          %2059 = vmatpush1.bf16.msra.mxu0 %v2040
          %2060 = vmatprep.subr.bf16.mxu0 0
          %2061 = vmatpush1.bf16.msra.mxu0 %v2039
          %2062 = vmatprep.subr.bf16.mxu0 0
          %2063 = vmatpush2.bf16.msra.mxu0 0
          %2064 = vmatprep.subr.bf16.mxu0 0
          %2065 = vmatpush2.bf16.msra.mxu0 0
          %2066 = vmatprep.subr.bf16.mxu0 0
          %2067 = vmatpush2.bf16.msra.mxu0 0
          %2068 = vmatprep.subr.bf16.mxu0 0
          %2069 = vmatpush2.bf16.msra.mxu0 0
          %2070 = vmatprep.subr.bf16.mxu0 0
          %2071 = vmatpush2.bf16.msra.mxu0 0
          %2072 = vmatprep.subr.bf16.mxu0 0
          %2073 = vmatpush2.bf16.msra.mxu0 0
          %2074 = vmatprep.subr.bf16.mxu0 0
          %2075 = vmatpush2.bf16.msra.mxu0 0
          %2076 = vmatprep.subr.bf16.mxu0 0
          %2077 = vmatpush2.bf16.msra.mxu0 0
          %2078 = vmatprep.mubr.bf16.mxu0 0
          %2079 = vmatmul.mubr.bf16.gmra.mxu0 %v2044
          %v2080 = vpop.f32.mrf.mxu0
          %v2081 = vadd.f32 %v2022, %v2080
          %v2082 = vpop.f32.mrf.mxu0
          %v2083 = vpop.f32.mrf.mxu0
          %v2084 = vpop.f32.mrf.mxu0
          %2085 = vdwg.mxu0
          %vm2086 = vcmask 1041408
          %v2087 = vsel %vm2086, %v2081, -inf
          %2088 = vmax.xlane.f32.xlu0 %v2087
          %v2089 = vpop.xlane.xlu0 %2088
          %v2090 = vsub.f32 %v2081, %v2089
          %v2091 = vmul.f32 %v2090, 1.442695
          %v2092 = vpow.pop %v2091
          %v2093 = vsel %vm2086, %v2092, 0.0
          %2094 = vadd.xlane.f32.xlu0 %v2093
          %v2095 = vpop.xlane.xlu0 %2094
          %v2096 = vlog2.pop %v2095
          %v2097 = vmul.f32 %v2096, 0.6931472
          %v2098 = vsub.f32 %v2090, %v2097
          %2099 = vst [vmem:[#allocation3] sm:$0x3] %v2098
        $region64: #{bert_lm_forward.1} parent=55 // pred_fallthru
          _
        // Predicated region
        $region65: #{bert_lm_forward.1} parent=55 // pred_check
          %p2100 = pneg %p251
        $region66: #{bert_lm_forward.1} parent=55 // pred_check_branch
          %2102 = sbr.rel (%p2100) target = $region68
        $region67: #{bert_lm_forward.1} parent=55 // pred_region
          %s2104 = ssub.s32 32, 32
          %2105 = vsyncadd [#allocation4], %s2104
          %s2107 = sshll.u32 [#allocation3], 4
          %s2108 = int_to_ptr.vmem [resolvable:$true] %s2107
          %2110 = dma.vmem_to_hbm [thread:$0]  %s2108, 32, %s9, [#allocation4]
        $region68: #{bert_lm_forward.1} parent=55 // pred_fallthru
          _
        // Predicated region
        $region69: #{bert_lm_forward.1} parent=55 // pred_check
          %p2111 = pneg %p272
        $region70: #{bert_lm_forward.1} parent=55 // pred_check_branch
          %2113 = sbr.rel (%p2111) target = $region72
        $region71: #{bert_lm_forward.1} parent=55 // pred_region
          %s2115 = ssub.s32 256, 256
          %2116 = vsyncadd [#allocation6], %s2115
          %s2117 = sshll.u32 [#allocation5], 4
          %s2118 = int_to_ptr.vmem [resolvable:$true] %s2117
          %2123 = dma.vmem_to_hbm [thread:$0]  %s2118, 256, %s10, [#allocation6], 128, 128, 8
        $region72: #{bert_lm_forward.1} parent=55 // pred_fallthru
          _
        // Predicated region
        $region73: #{bert_lm_forward.1} parent=55 // pred_check
          %p2124 = pneg %p251
        $region74: #{bert_lm_forward.1} parent=55 // pred_check_branch
          %2126 = sbr.rel (%p2124) target = $region76
        $region75: #{bert_lm_forward.1} parent=55 // pred_region
          %2127 = dma.done [#allocation4], 32
        $region76: #{bert_lm_forward.1} parent=55 // pred_fallthru
          _
        // Predicated region
        $region77: #{bert_lm_forward.1} parent=55 // pred_check
          %p2128 = pneg %p272
        $region78: #{bert_lm_forward.1} parent=55 // pred_check_branch
          %2130 = sbr.rel (%p2128) target = $region80
        $region79: #{bert_lm_forward.1} parent=55 // pred_region
          %2131 = dma.done [#allocation6], 256
        $region80: #{bert_lm_forward.1} parent=55 // pred_fallthru
          _
      $region56: #{bert_lm_forward.1} parent=5 // pred_fallthru
        _
      %p2132 = scmp.le.s32.totalorder 2, %s19
      // Predicated region
      $region81: #{bert_lm_forward.1} parent=5 // pred_check
        %p2133 = pneg %p2132
      $region82: #{bert_lm_forward.1} parent=5 // pred_check_branch
        %2135 = sbr.rel (%p2133) target = $region84
      $region83: #{bert_lm_forward.1} parent=5 // pred_region
        %s2136 = ssub.s32 %s19, 2
      $region84: #{bert_lm_forward.1} parent=5 // pred_fallthru
        _
    $region6: #{bert_lm_forward.1} parent=1 // loop_footer
      %s23 = sadd.s32 1, %s19
    $region7: #{bert_lm_forward.1} parent=1 // loop_footer_branch
      %18 = sbr.rel target = $region3
    $region8: #{bert_lm_forward.1} parent=1 // loop_exit
      _
    %2137 = vsyncpa [#allocation4], 1
    %s2138 = scalar_lea.sflag [#allocation4], 1
    %2139 = vsyncpa %s2138, 1
    %2140 = vsyncpa [#allocation6], 1

</llo_original>
